<compile_context>
chip_gen: v7x
topology: tpu7x:2x2x1
jax: 0.10.0
libtpu: 0.0.40
codegen_flags: <defaults>
</compile_context>

<pallas_src>
import functools

import jax
import jax.numpy as jnp
import numpy as np
from jax.experimental import pallas as pl
from jax.experimental.pallas import tpu as pltpu


def _decoder_lstm_wavefront_kernel(*refs, hidden, num_layers, seq_len, enc_len, batch):
    """Fused wavefront multi-layer LSTM + final ReLU, single invocation (no grid).

    refs = (enc_ref, w_ih0, w_hh0, b0, w_cat_1, b_1, ..., w_cat_{L-1}, b_{L-1}, out_ref)
      enc_ref : (T_enc*B, I) bf16  time-major-flattened encoded; step t = rows [t*B:(t+1)*B)
      w_ih0   : (I, 4H)  bf16      gate column order i, f, o, g
      w_hh0   : (H, 4H)  bf16
      b0      : (1, 4H)  f32       (= b_ih + b_hh)
      w_cat_l : (2H, 4H) bf16      rows = [W_ih_l ; W_hh_l]  (fused input+recurrent matmul)
      b_l     : (1, 4H)  f32
      out_ref : (B, T*H) f32       lane-dense output slab; reshaped to (B, T, H) by wrapper
    """
    H, L, T, T_enc, B = hidden, num_layers, seq_len, enc_len, batch
    f32, bf16 = jnp.float32, jnp.bfloat16

    enc_ref = refs[0]
    out_ref = refs[-1]
    w_ih0 = refs[1][...]
    w_hh0 = refs[2][...]
    b0 = refs[3][...]
    upper = [(refs[4 + 2 * i][...], refs[5 + 2 * i][...]) for i in range(L - 1)]

    # Hoisted layer-0 input projection: ONE MXU matmul over all timesteps (bf16 in, f32 acc).
    xg0 = jnp.dot(enc_ref[...], w_ih0, preferred_element_type=f32) + b0     # (T_enc*B, 4H)
    pad_gates0 = jnp.broadcast_to(b0, (B, 4 * H))   # zero-padded steps contribute bias only

    def cell(gates, c_prev):
        # Gate columns packed (i, f, o, g): one sigmoid over 3H contiguous lanes,
        # one tanh over the last H lanes, plus tanh(c)  -> 3 EUP pushes per cell.
        sig = jax.nn.sigmoid(gates[:, :3 * H])
        g_g = jnp.tanh(gates[:, 3 * H:])
        i_g, f_g, o_g = sig[:, :H], sig[:, H:2 * H], sig[:, 2 * H:]
        c_new = f_g * c_prev + i_g * g_g
        h_new = o_g * jnp.tanh(c_new)
        return h_new, c_new

    # TODO(synk): torch h0/c0 are uninitialized; zeros used for determinism.
    h = [jnp.zeros((B, H), f32) for _ in range(L)]
    c = [jnp.zeros((B, H), f32) for _ in range(L)]

    # Wavefront: at global step s, layer l processes time t = s - l.  Cells within one step
    # only read the previous step's h snapshot, so they are independent -> serial chain of
    # T + L - 1 cells (vs T*L sequentially) with L-way ILP for the LLO scheduler.
    for s in range(T + L - 1):
        h_prev = list(h)

        if s < T:  # ---- layer 0, time s --------------------------------------------------
            x_gates = xg0[s * B:(s + 1) * B, :] if s < T_enc else pad_gates0
            gates0 = x_gates + jnp.dot(h_prev[0].astype(bf16), w_hh0,
                                       preferred_element_type=f32)
            h[0], c[0] = cell(gates0, c[0])
            if L == 1:
                out_ref[:, s * H:(s + 1) * H] = jnp.maximum(h[0], 0.0).astype(out_ref.dtype)

        for l in range(1, L):  # ---- layer l, time s - l (fused [x_in ; h_prev] matmul) ----
            t = s - l
            if 0 <= t < T:
                w_cat, b_l = upper[l - 1]
                x_in = jnp.concatenate([h_prev[l - 1], h_prev[l]], axis=1).astype(bf16)
                gates = jnp.dot(x_in, w_cat, preferred_element_type=f32) + b_l
                h[l], c[l] = cell(gates, c[l])
                if l == L - 1:  # top layer -> ReLU + in-place store into the output slab
                    out_ref[:, t * H:(t + 1) * H] = jnp.maximum(h[l], 0.0).astype(out_ref.dtype)


def _pack_params_for_kernel(params):
    """Repack torch-gate-order (i,f,g,o) params into the kernel layout.

    Columns reordered to (i, f, o, g); layers >= 1 get [W_ih ; W_hh] row-concatenated for the
    fused per-step matmul; matmul operands cast to bf16 (f32 accumulate inside the kernel);
    biases stay f32.  All of this is trace-time / wrapper-side work, off the kernel path.
    """
    H = params[0][1].shape[0]

    def reorder(m):
        i, f, g, o = (m[..., k * H:(k + 1) * H] for k in range(4))
        return jnp.concatenate([i, f, o, g], axis=-1)

    packed = []
    for layer, (w_ih, w_hh, b) in enumerate(params):
        w_ih_r = reorder(w_ih).astype(jnp.bfloat16)
        w_hh_r = reorder(w_hh).astype(jnp.bfloat16)
        b_r = reorder(b).astype(jnp.float32)
        if layer == 0:
            packed.extend([w_ih_r, w_hh_r, b_r])
        else:
            packed.extend([jnp.concatenate([w_ih_r, w_hh_r], axis=0), b_r])
    return packed


def decoder_lstm_pallas(encoded, params, seq_len):
    """encoded: (B, T_enc, input_size) with T_enc <= seq_len; params: [(W_ih, W_hh, b), ...].

    Returns (B, seq_len, H) float32 with ReLU applied.
    """
    B, T_enc, I = encoded.shape
    H = params[0][1].shape[0]          # W_hh: (H, 4H)
    num_layers = len(params)

    # Time-major flatten so step t is the contiguous sublane slice [t*B:(t+1)*B, :] of one
    # hoisted matmul operand; bf16 operand cast done here (outside the kernel).
    enc_flat = jnp.swapaxes(encoded, 0, 1).reshape(T_enc * B, I).astype(jnp.bfloat16)

    kernel = functools.partial(_decoder_lstm_wavefront_kernel, hidden=H,
                               num_layers=num_layers, seq_len=seq_len,
                               enc_len=T_enc, batch=B)
    vmem = pl.BlockSpec(memory_space=pltpu.MemorySpace.VMEM)
    inputs = [enc_flat] + _pack_params_for_kernel(params)

    # Gridless: the recurrence is inherently serial and everything (< 100 KB) fits VMEM on
    # v5e/v6e/v7x.  Output is a lane-dense (B, T*H) slab (256 lanes, multiple of 128) so the
    # single HBM writeback is an unmasked dense store; the reshape below is free.
    # Scale-up notes (v7x): for large batch add a leading batch grid axis marked "parallel"
    # (second TensorCore); for large H/num_layers budget bf16 weights + double-buffering
    # against 64 MiB VMEM (not 128 MiB) and tile W_ih/W_hh on the 4H axis.
    out_flat = pl.pallas_call(
        kernel,
        out_shape=jax.ShapeDtypeStruct((B, seq_len * H), jnp.float32),
        in_specs=[vmem] * len(inputs),
        out_specs=vmem,
    )(*inputs)
    return out_flat.reshape(B, seq_len, H)


@jax.jit
def decoder_rnn_forward(features, encoded, params):
    """features: (B, T_feat, any) -- only its sequence length is used (padding target).
    encoded: (B, T_enc, hidden_size). Returns (B, T_feat, output_size)."""
    t_target = features.shape[1]
    if encoded.shape[1] > t_target:            # pad_sequences would truncate
        encoded = encoded[:, :t_target, :]
    return decoder_lstm_pallas(encoded, params, t_target)


def init_decoder_params(hidden_size, output_size, num_layers, key):
    """Deterministic parameter init mirroring the torch module's shapes.

    Layer 0: xavier_uniform(weight_ih, gain=sqrt(2)), xavier_uniform(weight_hh, gain=sqrt(3)).
    Other layers / biases: torch default uniform(-1/sqrt(H), 1/sqrt(H)).
    Stored transposed: W_ih (in, 4H), W_hh (H, 4H). Gate order i, f, g, o. b = b_ih + b_hh.
    """
    params = []
    H = output_size
    for layer in range(num_layers):
        in_dim = hidden_size if layer == 0 else output_size
        key, k1, k2, k3, k4 = jax.random.split(key, 5)
        if layer == 0:
            bound_ih = np.sqrt(2.0) * np.sqrt(6.0 / (in_dim + 4 * H))
            bound_hh = np.sqrt(3.0) * np.sqrt(6.0 / (H + 4 * H))
        else:
            bound_ih = 1.0 / np.sqrt(H)
            bound_hh = 1.0 / np.sqrt(H)
        bound_b = 1.0 / np.sqrt(H)
        w_ih = jax.random.uniform(k1, (in_dim, 4 * H), jnp.float32, -bound_ih, bound_ih)
        w_hh = jax.random.uniform(k2, (H, 4 * H), jnp.float32, -bound_hh, bound_hh)
        b_ih = jax.random.uniform(k3, (4 * H,), jnp.float32, -bound_b, bound_b)
        b_hh = jax.random.uniform(k4, (4 * H,), jnp.float32, -bound_b, bound_b)
        params.append((w_ih, w_hh, (b_ih + b_hh).reshape(1, 4 * H)))
    return params


def _decoder_reference(features, encoded, params):
    """Pure-JAX f32 reference (zero-padded multi-layer LSTM + ReLU), torch gate order."""
    t_target = features.shape[1]
    x = encoded[:, :t_target, :]
    if t_target > x.shape[1]:
        x = jnp.pad(x, ((0, 0), (0, t_target - x.shape[1]), (0, 0)))
    hp = jax.lax.Precision.HIGHEST
    for w_ih, w_hh, b in params:
        B, _, _ = x.shape
        H = w_hh.shape[0]

        def step(carry, x_t, w_ih=w_ih, w_hh=w_hh, b=b, H=H):
            h, c = carry
            gates = (jnp.dot(x_t, w_ih, precision=hp)
                     + jnp.dot(h, w_hh, precision=hp) + b[0])
            i = jax.nn.sigmoid(gates[:, 0 * H:1 * H])
            f = jax.nn.sigmoid(gates[:, 1 * H:2 * H])
            g = jnp.tanh(gates[:, 2 * H:3 * H])
            o = jax.nn.sigmoid(gates[:, 3 * H:4 * H])
            c = f * c + i * g
            h = o * jnp.tanh(c)
            return (h, c), h

        init = (jnp.zeros((B, H), jnp.float32), jnp.zeros((B, H), jnp.float32))
        _, hs = jax.lax.scan(step, init, jnp.swapaxes(x, 0, 1))
        x = jnp.swapaxes(hs, 0, 1)
    return jnp.maximum(x, 0.0)


if __name__ == "__main__":
    hidden_size = 32      # LSTM input size
    output_size = 32      # LSTM hidden size
    num_layers = 2
    batch = 2
    t_feat = 8            # target sequence length (from `features`)
    t_enc = 5             # encoded sequence length (zero-padded to t_feat inside the kernel)

    key = jax.random.PRNGKey(0)
    k_feat, k_enc, k_par = jax.random.split(key, 3)

    features = jax.random.normal(k_feat, (batch, t_feat, hidden_size), jnp.float32)
    encoded = jax.random.normal(k_enc, (batch, t_enc, hidden_size), jnp.float32)
    params = init_decoder_params(hidden_size, output_size, num_layers, k_par)

    out = decoder_rnn_forward(features, encoded, params)
    out = jax.block_until_ready(out)

    assert out.shape == (batch, t_feat, output_size), out.shape
    assert out.dtype == jnp.float32
    assert bool(jnp.all(out >= 0.0))               # ReLU applied
    assert bool(jnp.all(jnp.isfinite(out)))

    # Numerical check against a pure-JAX f32 reference.  Tolerance covers the bf16 MXU
    # operand cast (f32 accumulation); a structural bug gives errors O(0.1 - 1.0).
    ref = jax.block_until_ready(_decoder_reference(features, encoded, params))
    err = jnp.abs(out - ref)
    max_err = float(jnp.max(err))
    mean_err = float(jnp.mean(err))
    assert max_err < 8e-2, max_err
    assert mean_err < 1.5e-2, mean_err

    print("KERNEL_OK")
</pallas_src>

<mosaic_0001>
module attributes {stable_mosaic.version = 11 : i64} {
  func.func @_decoder_lstm_wavefront_kernel(%arg0: memref<10x32xbf16, #tpu.memory_space<vmem>>, %arg1: memref<32x128xbf16, #tpu.memory_space<vmem>>, %arg2: memref<32x128xbf16, #tpu.memory_space<vmem>>, %arg3: memref<1x128xf32, #tpu.memory_space<vmem>>, %arg4: memref<64x128xbf16, #tpu.memory_space<vmem>>, %arg5: memref<1x128xf32, #tpu.memory_space<vmem>>, %arg6: memref<2x256xf32, #tpu.memory_space<vmem>>) attributes {dimension_semantics = [], scalar_prefetch = 0 : i64, scratch_operands = 0 : i64, tpu.core_type = #tpu.core_type<tc>} {
    %c0 = arith.constant 0 : index
    %c0_0 = arith.constant 0 : index
    %0 = vector.load %arg1[%c0, %c0_0] : memref<32x128xbf16, #tpu.memory_space<vmem>>, vector<32x128xbf16>
    %c0_1 = arith.constant 0 : index
    %c0_2 = arith.constant 0 : index
    %1 = vector.load %arg2[%c0_1, %c0_2] : memref<32x128xbf16, #tpu.memory_space<vmem>>, vector<32x128xbf16>
    %c0_3 = arith.constant 0 : index
    %c0_4 = arith.constant 0 : index
    %2 = vector.load %arg3[%c0_3, %c0_4] : memref<1x128xf32, #tpu.memory_space<vmem>>, vector<1x128xf32>
    %c0_5 = arith.constant 0 : index
    %c0_6 = arith.constant 0 : index
    %3 = vector.load %arg4[%c0_5, %c0_6] : memref<64x128xbf16, #tpu.memory_space<vmem>>, vector<64x128xbf16>
    %c0_7 = arith.constant 0 : index
    %c0_8 = arith.constant 0 : index
    %4 = vector.load %arg5[%c0_7, %c0_8] : memref<1x128xf32, #tpu.memory_space<vmem>>, vector<1x128xf32>
    %c0_9 = arith.constant 0 : index
    %c0_10 = arith.constant 0 : index
    %5 = vector.load %arg0[%c0_9, %c0_10] : memref<10x32xbf16, #tpu.memory_space<vmem>>, vector<10x32xbf16>
    %cst = arith.constant dense<0.000000e+00> : vector<10x128xf32>
    %6 = tpu.matmul %5, %0, %cst {dimension_numbers = #tpu.dot_dimension_numbers<[1], [0], [0], [1], [0, 0, 1, 1], [], []>} : vector<10x32xbf16>, vector<32x128xbf16>, vector<10x128xf32> -> vector<10x128xf32>
    %7 = vector.broadcast %2 : vector<1x128xf32> to vector<10x128xf32>
    %8 = arith.addf %6, %7 : vector<10x128xf32>
    %9 = vector.shape_cast %2 : vector<1x128xf32> to vector<1x128xf32>
    %10 = vector.broadcast %9 : vector<1x128xf32> to vector<2x128xf32>
    %cst_11 = arith.constant 0.000000e+00 : f32
    %11 = vector.broadcast %cst_11 : f32 to vector<2x32xf32>
    %cst_12 = arith.constant 0.000000e+00 : f32
    %12 = vector.broadcast %cst_12 : f32 to vector<2x32xf32>
    %cst_13 = arith.constant 0.000000e+00 : f32
    %13 = vector.broadcast %cst_13 : f32 to vector<2x32xf32>
    %cst_14 = arith.constant 0.000000e+00 : f32
    %14 = vector.broadcast %cst_14 : f32 to vector<2x32xf32>
    %15 = vector.extract_strided_slice %8 {offsets = [0, 0], sizes = [2, 128], strides = [1, 1]} : vector<10x128xf32> to vector<2x128xf32>
    %16 = arith.truncf %11 : vector<2x32xf32> to vector<2x32xbf16>
    %cst_15 = arith.constant dense<0.000000e+00> : vector<2x128xf32>
    %17 = tpu.matmul %16, %1, %cst_15 {dimension_numbers = #tpu.dot_dimension_numbers<[1], [0], [0], [1], [0, 0, 1, 1], [], []>} : vector<2x32xbf16>, vector<32x128xbf16>, vector<2x128xf32> -> vector<2x128xf32>
    %18 = arith.addf %15, %17 : vector<2x128xf32>
    %19 = vector.extract_strided_slice %18 {offsets = [0, 0], sizes = [2, 96], strides = [1, 1]} : vector<2x128xf32> to vector<2x96xf32>
    %20 = arith.negf %19 : vector<2x96xf32>
    %21 = math.exp %20 : vector<2x96xf32>
    %cst_16 = arith.constant 1.000000e+00 : f32
    %22 = vector.broadcast %cst_16 : f32 to vector<2x96xf32>
    %23 = arith.addf %22, %21 : vector<2x96xf32>
    %24 = arith.divf %22, %23 : vector<2x96xf32>
    %25 = vector.extract_strided_slice %18 {offsets = [0, 96], sizes = [2, 32], strides = [1, 1]} : vector<2x128xf32> to vector<2x32xf32>
    %26 = math.tanh %25 : vector<2x32xf32>
    %27 = vector.extract_strided_slice %24 {offsets = [0, 0], sizes = [2, 32], strides = [1, 1]} : vector<2x96xf32> to vector<2x32xf32>
    %28 = vector.extract_strided_slice %24 {offsets = [0, 32], sizes = [2, 32], strides = [1, 1]} : vector<2x96xf32> to vector<2x32xf32>
    %29 = vector.extract_strided_slice %24 {offsets = [0, 64], sizes = [2, 32], strides = [1, 1]} : vector<2x96xf32> to vector<2x32xf32>
    %30 = arith.mulf %28, %13 : vector<2x32xf32>
    %31 = arith.mulf %27, %26 : vector<2x32xf32>
    %32 = arith.addf %30, %31 : vector<2x32xf32>
    %33 = math.tanh %32 : vector<2x32xf32>
    %34 = arith.mulf %29, %33 : vector<2x32xf32>
    %35 = vector.extract_strided_slice %8 {offsets = [2, 0], sizes = [2, 128], strides = [1, 1]} : vector<10x128xf32> to vector<2x128xf32>
    %36 = arith.truncf %34 : vector<2x32xf32> to vector<2x32xbf16>
    %cst_17 = arith.constant dense<0.000000e+00> : vector<2x128xf32>
    %37 = tpu.matmul %36, %1, %cst_17 {dimension_numbers = #tpu.dot_dimension_numbers<[1], [0], [0], [1], [0, 0, 1, 1], [], []>} : vector<2x32xbf16>, vector<32x128xbf16>, vector<2x128xf32> -> vector<2x128xf32>
    %38 = arith.addf %35, %37 : vector<2x128xf32>
    %39 = vector.extract_strided_slice %38 {offsets = [0, 0], sizes = [2, 96], strides = [1, 1]} : vector<2x128xf32> to vector<2x96xf32>
    %40 = arith.negf %39 : vector<2x96xf32>
    %41 = math.exp %40 : vector<2x96xf32>
    %cst_18 = arith.constant 1.000000e+00 : f32
    %42 = vector.broadcast %cst_18 : f32 to vector<2x96xf32>
    %43 = arith.addf %42, %41 : vector<2x96xf32>
    %44 = arith.divf %42, %43 : vector<2x96xf32>
    %45 = vector.extract_strided_slice %38 {offsets = [0, 96], sizes = [2, 32], strides = [1, 1]} : vector<2x128xf32> to vector<2x32xf32>
    %46 = math.tanh %45 : vector<2x32xf32>
    %47 = vector.extract_strided_slice %44 {offsets = [0, 0], sizes = [2, 32], strides = [1, 1]} : vector<2x96xf32> to vector<2x32xf32>
    %48 = vector.extract_strided_slice %44 {offsets = [0, 32], sizes = [2, 32], strides = [1, 1]} : vector<2x96xf32> to vector<2x32xf32>
    %49 = vector.extract_strided_slice %44 {offsets = [0, 64], sizes = [2, 32], strides = [1, 1]} : vector<2x96xf32> to vector<2x32xf32>
    %50 = arith.mulf %48, %32 : vector<2x32xf32>
    %51 = arith.mulf %47, %46 : vector<2x32xf32>
    %52 = arith.addf %50, %51 : vector<2x32xf32>
    %53 = math.tanh %52 : vector<2x32xf32>
    %54 = arith.mulf %49, %53 : vector<2x32xf32>
    %55 = tpu.concatenate %34, %12 in 1 : vector<2x32xf32>, vector<2x32xf32> -> vector<2x64xf32>
    %56 = arith.truncf %55 : vector<2x64xf32> to vector<2x64xbf16>
    %cst_19 = arith.constant dense<0.000000e+00> : vector<2x128xf32>
    %57 = tpu.matmul %56, %3, %cst_19 {dimension_numbers = #tpu.dot_dimension_numbers<[1], [0], [0], [1], [0, 0, 1, 1], [], []>} : vector<2x64xbf16>, vector<64x128xbf16>, vector<2x128xf32> -> vector<2x128xf32>
    %58 = vector.broadcast %4 : vector<1x128xf32> to vector<2x128xf32>
    %59 = arith.addf %57, %58 : vector<2x128xf32>
    %60 = vector.extract_strided_slice %59 {offsets = [0, 0], sizes = [2, 96], strides = [1, 1]} : vector<2x128xf32> to vector<2x96xf32>
    %61 = arith.negf %60 : vector<2x96xf32>
    %62 = math.exp %61 : vector<2x96xf32>
    %cst_20 = arith.constant 1.000000e+00 : f32
    %63 = vector.broadcast %cst_20 : f32 to vector<2x96xf32>
    %64 = arith.addf %63, %62 : vector<2x96xf32>
    %65 = arith.divf %63, %64 : vector<2x96xf32>
    %66 = vector.extract_strided_slice %59 {offsets = [0, 96], sizes = [2, 32], strides = [1, 1]} : vector<2x128xf32> to vector<2x32xf32>
    %67 = math.tanh %66 : vector<2x32xf32>
    %68 = vector.extract_strided_slice %65 {offsets = [0, 0], sizes = [2, 32], strides = [1, 1]} : vector<2x96xf32> to vector<2x32xf32>
    %69 = vector.extract_strided_slice %65 {offsets = [0, 32], sizes = [2, 32], strides = [1, 1]} : vector<2x96xf32> to vector<2x32xf32>
    %70 = vector.extract_strided_slice %65 {offsets = [0, 64], sizes = [2, 32], strides = [1, 1]} : vector<2x96xf32> to vector<2x32xf32>
    %71 = arith.mulf %69, %14 : vector<2x32xf32>
    %72 = arith.mulf %68, %67 : vector<2x32xf32>
    %73 = arith.addf %71, %72 : vector<2x32xf32>
    %74 = math.tanh %73 : vector<2x32xf32>
    %75 = arith.mulf %70, %74 : vector<2x32xf32>
    %cst_21 = arith.constant 0.000000e+00 : f32
    %76 = vector.broadcast %cst_21 : f32 to vector<2x32xf32>
    %77 = arith.maximumf %75, %76 : vector<2x32xf32>
    %c0_22 = arith.constant 0 : index
    %c0_23 = arith.constant 0 : index
    %78 = vector.load %arg6[%c0_22, %c0_23] : memref<2x256xf32, #tpu.memory_space<vmem>>, vector<2x32xf32>
    tpu.vector_store %arg6[%c0_22, %c0_23], %77 {strides = array<i32>} : memref<2x256xf32, #tpu.memory_space<vmem>>, vector<2x32xf32>,
    %79 = vector.extract_strided_slice %8 {offsets = [4, 0], sizes = [2, 128], strides = [1, 1]} : vector<10x128xf32> to vector<2x128xf32>
    %80 = arith.truncf %54 : vector<2x32xf32> to vector<2x32xbf16>
    %cst_24 = arith.constant dense<0.000000e+00> : vector<2x128xf32>
    %81 = tpu.matmul %80, %1, %cst_24 {dimension_numbers = #tpu.dot_dimension_numbers<[1], [0], [0], [1], [0, 0, 1, 1], [], []>} : vector<2x32xbf16>, vector<32x128xbf16>, vector<2x128xf32> -> vector<2x128xf32>
    %82 = arith.addf %79, %81 : vector<2x128xf32>
    %83 = vector.extract_strided_slice %82 {offsets = [0, 0], sizes = [2, 96], strides = [1, 1]} : vector<2x128xf32> to vector<2x96xf32>
    %84 = arith.negf %83 : vector<2x96xf32>
    %85 = math.exp %84 : vector<2x96xf32>
    %cst_25 = arith.constant 1.000000e+00 : f32
    %86 = vector.broadcast %cst_25 : f32 to vector<2x96xf32>
    %87 = arith.addf %86, %85 : vector<2x96xf32>
    %88 = arith.divf %86, %87 : vector<2x96xf32>
    %89 = vector.extract_strided_slice %82 {offsets = [0, 96], sizes = [2, 32], strides = [1, 1]} : vector<2x128xf32> to vector<2x32xf32>
    %90 = math.tanh %89 : vector<2x32xf32>
    %91 = vector.extract_strided_slice %88 {offsets = [0, 0], sizes = [2, 32], strides = [1, 1]} : vector<2x96xf32> to vector<2x32xf32>
    %92 = vector.extract_strided_slice %88 {offsets = [0, 32], sizes = [2, 32], strides = [1, 1]} : vector<2x96xf32> to vector<2x32xf32>
    %93 = vector.extract_strided_slice %88 {offsets = [0, 64], sizes = [2, 32], strides = [1, 1]} : vector<2x96xf32> to vector<2x32xf32>
    %94 = arith.mulf %92, %52 : vector<2x32xf32>
    %95 = arith.mulf %91, %90 : vector<2x32xf32>
    %96 = arith.addf %94, %95 : vector<2x32xf32>
    %97 = math.tanh %96 : vector<2x32xf32>
    %98 = arith.mulf %93, %97 : vector<2x32xf32>
    %99 = tpu.concatenate %54, %75 in 1 : vector<2x32xf32>, vector<2x32xf32> -> vector<2x64xf32>
    %100 = arith.truncf %99 : vector<2x64xf32> to vector<2x64xbf16>
    %cst_26 = arith.constant dense<0.000000e+00> : vector<2x128xf32>
    %101 = tpu.matmul %100, %3, %cst_26 {dimension_numbers = #tpu.dot_dimension_numbers<[1], [0], [0], [1], [0, 0, 1, 1], [], []>} : vector<2x64xbf16>, vector<64x128xbf16>, vector<2x128xf32> -> vector<2x128xf32>
    %102 = vector.broadcast %4 : vector<1x128xf32> to vector<2x128xf32>
    %103 = arith.addf %101, %102 : vector<2x128xf32>
    %104 = vector.extract_strided_slice %103 {offsets = [0, 0], sizes = [2, 96], strides = [1, 1]} : vector<2x128xf32> to vector<2x96xf32>
    %105 = arith.negf %104 : vector<2x96xf32>
    %106 = math.exp %105 : vector<2x96xf32>
    %cst_27 = arith.constant 1.000000e+00 : f32
    %107 = vector.broadcast %cst_27 : f32 to vector<2x96xf32>
    %108 = arith.addf %107, %106 : vector<2x96xf32>
    %109 = arith.divf %107, %108 : vector<2x96xf32>
    %110 = vector.extract_strided_slice %103 {offsets = [0, 96], sizes = [2, 32], strides = [1, 1]} : vector<2x128xf32> to vector<2x32xf32>
    %111 = math.tanh %110 : vector<2x32xf32>
    %112 = vector.extract_strided_slice %109 {offsets = [0, 0], sizes = [2, 32], strides = [1, 1]} : vector<2x96xf32> to vector<2x32xf32>
    %113 = vector.extract_strided_slice %109 {offsets = [0, 32], sizes = [2, 32], strides = [1, 1]} : vector<2x96xf32> to vector<2x32xf32>
    %114 = vector.extract_strided_slice %109 {offsets = [0, 64], sizes = [2, 32], strides = [1, 1]} : vector<2x96xf32> to vector<2x32xf32>
    %115 = arith.mulf %113, %73 : vector<2x32xf32>
    %116 = arith.mulf %112, %111 : vector<2x32xf32>
    %117 = arith.addf %115, %116 : vector<2x32xf32>
    %118 = math.tanh %117 : vector<2x32xf32>
    %119 = arith.mulf %114, %118 : vector<2x32xf32>
    %cst_28 = arith.constant 0.000000e+00 : f32
    %120 = vector.broadcast %cst_28 : f32 to vector<2x32xf32>
    %121 = arith.maximumf %119, %120 : vector<2x32xf32>
    %c0_29 = arith.constant 0 : index
    %c32 = arith.constant 32 : index
    %122 = vector.load %arg6[%c0_29, %c32] : memref<2x256xf32, #tpu.memory_space<vmem>>, vector<2x32xf32>
    tpu.vector_store %arg6[%c0_29, %c32], %121 {strides = array<i32>} : memref<2x256xf32, #tpu.memory_space<vmem>>, vector<2x32xf32>,
    %123 = vector.extract_strided_slice %8 {offsets = [6, 0], sizes = [2, 128], strides = [1, 1]} : vector<10x128xf32> to vector<2x128xf32>
    %124 = arith.truncf %98 : vector<2x32xf32> to vector<2x32xbf16>
    %cst_30 = arith.constant dense<0.000000e+00> : vector<2x128xf32>
    %125 = tpu.matmul %124, %1, %cst_30 {dimension_numbers = #tpu.dot_dimension_numbers<[1], [0], [0], [1], [0, 0, 1, 1], [], []>} : vector<2x32xbf16>, vector<32x128xbf16>, vector<2x128xf32> -> vector<2x128xf32>
    %126 = arith.addf %123, %125 : vector<2x128xf32>
    %127 = vector.extract_strided_slice %126 {offsets = [0, 0], sizes = [2, 96], strides = [1, 1]} : vector<2x128xf32> to vector<2x96xf32>
    %128 = arith.negf %127 : vector<2x96xf32>
    %129 = math.exp %128 : vector<2x96xf32>
    %cst_31 = arith.constant 1.000000e+00 : f32
    %130 = vector.broadcast %cst_31 : f32 to vector<2x96xf32>
    %131 = arith.addf %130, %129 : vector<2x96xf32>
    %132 = arith.divf %130, %131 : vector<2x96xf32>
    %133 = vector.extract_strided_slice %126 {offsets = [0, 96], sizes = [2, 32], strides = [1, 1]} : vector<2x128xf32> to vector<2x32xf32>
    %134 = math.tanh %133 : vector<2x32xf32>
    %135 = vector.extract_strided_slice %132 {offsets = [0, 0], sizes = [2, 32], strides = [1, 1]} : vector<2x96xf32> to vector<2x32xf32>
    %136 = vector.extract_strided_slice %132 {offsets = [0, 32], sizes = [2, 32], strides = [1, 1]} : vector<2x96xf32> to vector<2x32xf32>
    %137 = vector.extract_strided_slice %132 {offsets = [0, 64], sizes = [2, 32], strides = [1, 1]} : vector<2x96xf32> to vector<2x32xf32>
    %138 = arith.mulf %136, %96 : vector<2x32xf32>
    %139 = arith.mulf %135, %134 : vector<2x32xf32>
    %140 = arith.addf %138, %139 : vector<2x32xf32>
    %141 = math.tanh %140 : vector<2x32xf32>
    %142 = arith.mulf %137, %141 : vector<2x32xf32>
    %143 = tpu.concatenate %98, %119 in 1 : vector<2x32xf32>, vector<2x32xf32> -> vector<2x64xf32>
    %144 = arith.truncf %143 : vector<2x64xf32> to vector<2x64xbf16>
    %cst_32 = arith.constant dense<0.000000e+00> : vector<2x128xf32>
    %145 = tpu.matmul %144, %3, %cst_32 {dimension_numbers = #tpu.dot_dimension_numbers<[1], [0], [0], [1], [0, 0, 1, 1], [], []>} : vector<2x64xbf16>, vector<64x128xbf16>, vector<2x128xf32> -> vector<2x128xf32>
    %146 = vector.broadcast %4 : vector<1x128xf32> to vector<2x128xf32>
    %147 = arith.addf %145, %146 : vector<2x128xf32>
    %148 = vector.extract_strided_slice %147 {offsets = [0, 0], sizes = [2, 96], strides = [1, 1]} : vector<2x128xf32> to vector<2x96xf32>
    %149 = arith.negf %148 : vector<2x96xf32>
    %150 = math.exp %149 : vector<2x96xf32>
    %cst_33 = arith.constant 1.000000e+00 : f32
    %151 = vector.broadcast %cst_33 : f32 to vector<2x96xf32>
    %152 = arith.addf %151, %150 : vector<2x96xf32>
    %153 = arith.divf %151, %152 : vector<2x96xf32>
    %154 = vector.extract_strided_slice %147 {offsets = [0, 96], sizes = [2, 32], strides = [1, 1]} : vector<2x128xf32> to vector<2x32xf32>
    %155 = math.tanh %154 : vector<2x32xf32>
    %156 = vector.extract_strided_slice %153 {offsets = [0, 0], sizes = [2, 32], strides = [1, 1]} : vector<2x96xf32> to vector<2x32xf32>
    %157 = vector.extract_strided_slice %153 {offsets = [0, 32], sizes = [2, 32], strides = [1, 1]} : vector<2x96xf32> to vector<2x32xf32>
    %158 = vector.extract_strided_slice %153 {offsets = [0, 64], sizes = [2, 32], strides = [1, 1]} : vector<2x96xf32> to vector<2x32xf32>
    %159 = arith.mulf %157, %117 : vector<2x32xf32>
    %160 = arith.mulf %156, %155 : vector<2x32xf32>
    %161 = arith.addf %159, %160 : vector<2x32xf32>
    %162 = math.tanh %161 : vector<2x32xf32>
    %163 = arith.mulf %158, %162 : vector<2x32xf32>
    %cst_34 = arith.constant 0.000000e+00 : f32
    %164 = vector.broadcast %cst_34 : f32 to vector<2x32xf32>
    %165 = arith.maximumf %163, %164 : vector<2x32xf32>
    %c0_35 = arith.constant 0 : index
    %c64 = arith.constant 64 : index
    %166 = vector.load %arg6[%c0_35, %c64] : memref<2x256xf32, #tpu.memory_space<vmem>>, vector<2x32xf32>
    tpu.vector_store %arg6[%c0_35, %c64], %165 {strides = array<i32>} : memref<2x256xf32, #tpu.memory_space<vmem>>, vector<2x32xf32>,
    %167 = vector.extract_strided_slice %8 {offsets = [8, 0], sizes = [2, 128], strides = [1, 1]} : vector<10x128xf32> to vector<2x128xf32>
    %168 = arith.truncf %142 : vector<2x32xf32> to vector<2x32xbf16>
    %cst_36 = arith.constant dense<0.000000e+00> : vector<2x128xf32>
    %169 = tpu.matmul %168, %1, %cst_36 {dimension_numbers = #tpu.dot_dimension_numbers<[1], [0], [0], [1], [0, 0, 1, 1], [], []>} : vector<2x32xbf16>, vector<32x128xbf16>, vector<2x128xf32> -> vector<2x128xf32>
    %170 = arith.addf %167, %169 : vector<2x128xf32>
    %171 = vector.extract_strided_slice %170 {offsets = [0, 0], sizes = [2, 96], strides = [1, 1]} : vector<2x128xf32> to vector<2x96xf32>
    %172 = arith.negf %171 : vector<2x96xf32>
    %173 = math.exp %172 : vector<2x96xf32>
    %cst_37 = arith.constant 1.000000e+00 : f32
    %174 = vector.broadcast %cst_37 : f32 to vector<2x96xf32>
    %175 = arith.addf %174, %173 : vector<2x96xf32>
    %176 = arith.divf %174, %175 : vector<2x96xf32>
    %177 = vector.extract_strided_slice %170 {offsets = [0, 96], sizes = [2, 32], strides = [1, 1]} : vector<2x128xf32> to vector<2x32xf32>
    %178 = math.tanh %177 : vector<2x32xf32>
    %179 = vector.extract_strided_slice %176 {offsets = [0, 0], sizes = [2, 32], strides = [1, 1]} : vector<2x96xf32> to vector<2x32xf32>
    %180 = vector.extract_strided_slice %176 {offsets = [0, 32], sizes = [2, 32], strides = [1, 1]} : vector<2x96xf32> to vector<2x32xf32>
    %181 = vector.extract_strided_slice %176 {offsets = [0, 64], sizes = [2, 32], strides = [1, 1]} : vector<2x96xf32> to vector<2x32xf32>
    %182 = arith.mulf %180, %140 : vector<2x32xf32>
    %183 = arith.mulf %179, %178 : vector<2x32xf32>
    %184 = arith.addf %182, %183 : vector<2x32xf32>
    %185 = math.tanh %184 : vector<2x32xf32>
    %186 = arith.mulf %181, %185 : vector<2x32xf32>
    %187 = tpu.concatenate %142, %163 in 1 : vector<2x32xf32>, vector<2x32xf32> -> vector<2x64xf32>
    %188 = arith.truncf %187 : vector<2x64xf32> to vector<2x64xbf16>
    %cst_38 = arith.constant dense<0.000000e+00> : vector<2x128xf32>
    %189 = tpu.matmul %188, %3, %cst_38 {dimension_numbers = #tpu.dot_dimension_numbers<[1], [0], [0], [1], [0, 0, 1, 1], [], []>} : vector<2x64xbf16>, vector<64x128xbf16>, vector<2x128xf32> -> vector<2x128xf32>
    %190 = vector.broadcast %4 : vector<1x128xf32> to vector<2x128xf32>
    %191 = arith.addf %189, %190 : vector<2x128xf32>
    %192 = vector.extract_strided_slice %191 {offsets = [0, 0], sizes = [2, 96], strides = [1, 1]} : vector<2x128xf32> to vector<2x96xf32>
    %193 = arith.negf %192 : vector<2x96xf32>
    %194 = math.exp %193 : vector<2x96xf32>
    %cst_39 = arith.constant 1.000000e+00 : f32
    %195 = vector.broadcast %cst_39 : f32 to vector<2x96xf32>
    %196 = arith.addf %195, %194 : vector<2x96xf32>
    %197 = arith.divf %195, %196 : vector<2x96xf32>
    %198 = vector.extract_strided_slice %191 {offsets = [0, 96], sizes = [2, 32], strides = [1, 1]} : vector<2x128xf32> to vector<2x32xf32>
    %199 = math.tanh %198 : vector<2x32xf32>
    %200 = vector.extract_strided_slice %197 {offsets = [0, 0], sizes = [2, 32], strides = [1, 1]} : vector<2x96xf32> to vector<2x32xf32>
    %201 = vector.extract_strided_slice %197 {offsets = [0, 32], sizes = [2, 32], strides = [1, 1]} : vector<2x96xf32> to vector<2x32xf32>
    %202 = vector.extract_strided_slice %197 {offsets = [0, 64], sizes = [2, 32], strides = [1, 1]} : vector<2x96xf32> to vector<2x32xf32>
    %203 = arith.mulf %201, %161 : vector<2x32xf32>
    %204 = arith.mulf %200, %199 : vector<2x32xf32>
    %205 = arith.addf %203, %204 : vector<2x32xf32>
    %206 = math.tanh %205 : vector<2x32xf32>
    %207 = arith.mulf %202, %206 : vector<2x32xf32>
    %cst_40 = arith.constant 0.000000e+00 : f32
    %208 = vector.broadcast %cst_40 : f32 to vector<2x32xf32>
    %209 = arith.maximumf %207, %208 : vector<2x32xf32>
    %c0_41 = arith.constant 0 : index
    %c96 = arith.constant 96 : index
    %210 = vector.load %arg6[%c0_41, %c96] : memref<2x256xf32, #tpu.memory_space<vmem>>, vector<2x32xf32>
    tpu.vector_store %arg6[%c0_41, %c96], %209 {strides = array<i32>} : memref<2x256xf32, #tpu.memory_space<vmem>>, vector<2x32xf32>,
    %211 = arith.truncf %186 : vector<2x32xf32> to vector<2x32xbf16>
    %cst_42 = arith.constant dense<0.000000e+00> : vector<2x128xf32>
    %212 = tpu.matmul %211, %1, %cst_42 {dimension_numbers = #tpu.dot_dimension_numbers<[1], [0], [0], [1], [0, 0, 1, 1], [], []>} : vector<2x32xbf16>, vector<32x128xbf16>, vector<2x128xf32> -> vector<2x128xf32>
    %213 = arith.addf %10, %212 : vector<2x128xf32>
    %214 = vector.extract_strided_slice %213 {offsets = [0, 0], sizes = [2, 96], strides = [1, 1]} : vector<2x128xf32> to vector<2x96xf32>
    %215 = arith.negf %214 : vector<2x96xf32>
    %216 = math.exp %215 : vector<2x96xf32>
    %cst_43 = arith.constant 1.000000e+00 : f32
    %217 = vector.broadcast %cst_43 : f32 to vector<2x96xf32>
    %218 = arith.addf %217, %216 : vector<2x96xf32>
    %219 = arith.divf %217, %218 : vector<2x96xf32>
    %220 = vector.extract_strided_slice %213 {offsets = [0, 96], sizes = [2, 32], strides = [1, 1]} : vector<2x128xf32> to vector<2x32xf32>
    %221 = math.tanh %220 : vector<2x32xf32>
    %222 = vector.extract_strided_slice %219 {offsets = [0, 0], sizes = [2, 32], strides = [1, 1]} : vector<2x96xf32> to vector<2x32xf32>
    %223 = vector.extract_strided_slice %219 {offsets = [0, 32], sizes = [2, 32], strides = [1, 1]} : vector<2x96xf32> to vector<2x32xf32>
    %224 = vector.extract_strided_slice %219 {offsets = [0, 64], sizes = [2, 32], strides = [1, 1]} : vector<2x96xf32> to vector<2x32xf32>
    %225 = arith.mulf %223, %184 : vector<2x32xf32>
    %226 = arith.mulf %222, %221 : vector<2x32xf32>
    %227 = arith.addf %225, %226 : vector<2x32xf32>
    %228 = math.tanh %227 : vector<2x32xf32>
    %229 = arith.mulf %224, %228 : vector<2x32xf32>
    %230 = tpu.concatenate %186, %207 in 1 : vector<2x32xf32>, vector<2x32xf32> -> vector<2x64xf32>
    %231 = arith.truncf %230 : vector<2x64xf32> to vector<2x64xbf16>
    %cst_44 = arith.constant dense<0.000000e+00> : vector<2x128xf32>
    %232 = tpu.matmul %231, %3, %cst_44 {dimension_numbers = #tpu.dot_dimension_numbers<[1], [0], [0], [1], [0, 0, 1, 1], [], []>} : vector<2x64xbf16>, vector<64x128xbf16>, vector<2x128xf32> -> vector<2x128xf32>
    %233 = vector.broadcast %4 : vector<1x128xf32> to vector<2x128xf32>
    %234 = arith.addf %232, %233 : vector<2x128xf32>
    %235 = vector.extract_strided_slice %234 {offsets = [0, 0], sizes = [2, 96], strides = [1, 1]} : vector<2x128xf32> to vector<2x96xf32>
    %236 = arith.negf %235 : vector<2x96xf32>
    %237 = math.exp %236 : vector<2x96xf32>
    %cst_45 = arith.constant 1.000000e+00 : f32
    %238 = vector.broadcast %cst_45 : f32 to vector<2x96xf32>
    %239 = arith.addf %238, %237 : vector<2x96xf32>
    %240 = arith.divf %238, %239 : vector<2x96xf32>
    %241 = vector.extract_strided_slice %234 {offsets = [0, 96], sizes = [2, 32], strides = [1, 1]} : vector<2x128xf32> to vector<2x32xf32>
    %242 = math.tanh %241 : vector<2x32xf32>
    %243 = vector.extract_strided_slice %240 {offsets = [0, 0], sizes = [2, 32], strides = [1, 1]} : vector<2x96xf32> to vector<2x32xf32>
    %244 = vector.extract_strided_slice %240 {offsets = [0, 32], sizes = [2, 32], strides = [1, 1]} : vector<2x96xf32> to vector<2x32xf32>
    %245 = vector.extract_strided_slice %240 {offsets = [0, 64], sizes = [2, 32], strides = [1, 1]} : vector<2x96xf32> to vector<2x32xf32>
    %246 = arith.mulf %244, %205 : vector<2x32xf32>
    %247 = arith.mulf %243, %242 : vector<2x32xf32>
    %248 = arith.addf %246, %247 : vector<2x32xf32>
    %249 = math.tanh %248 : vector<2x32xf32>
    %250 = arith.mulf %245, %249 : vector<2x32xf32>
    %cst_46 = arith.constant 0.000000e+00 : f32
    %251 = vector.broadcast %cst_46 : f32 to vector<2x32xf32>
    %252 = arith.maximumf %250, %251 : vector<2x32xf32>
    %c0_47 = arith.constant 0 : index
    %c128 = arith.constant 128 : index
    %253 = vector.load %arg6[%c0_47, %c128] : memref<2x256xf32, #tpu.memory_space<vmem>>, vector<2x32xf32>
    tpu.vector_store %arg6[%c0_47, %c128], %252 {strides = array<i32>} : memref<2x256xf32, #tpu.memory_space<vmem>>, vector<2x32xf32>,
    %254 = arith.truncf %229 : vector<2x32xf32> to vector<2x32xbf16>
    %cst_48 = arith.constant dense<0.000000e+00> : vector<2x128xf32>
    %255 = tpu.matmul %254, %1, %cst_48 {dimension_numbers = #tpu.dot_dimension_numbers<[1], [0], [0], [1], [0, 0, 1, 1], [], []>} : vector<2x32xbf16>, vector<32x128xbf16>, vector<2x128xf32> -> vector<2x128xf32>
    %256 = arith.addf %10, %255 : vector<2x128xf32>
    %257 = vector.extract_strided_slice %256 {offsets = [0, 0], sizes = [2, 96], strides = [1, 1]} : vector<2x128xf32> to vector<2x96xf32>
    %258 = arith.negf %257 : vector<2x96xf32>
    %259 = math.exp %258 : vector<2x96xf32>
    %cst_49 = arith.constant 1.000000e+00 : f32
    %260 = vector.broadcast %cst_49 : f32 to vector<2x96xf32>
    %261 = arith.addf %260, %259 : vector<2x96xf32>
    %262 = arith.divf %260, %261 : vector<2x96xf32>
    %263 = vector.extract_strided_slice %256 {offsets = [0, 96], sizes = [2, 32], strides = [1, 1]} : vector<2x128xf32> to vector<2x32xf32>
    %264 = math.tanh %263 : vector<2x32xf32>
    %265 = vector.extract_strided_slice %262 {offsets = [0, 0], sizes = [2, 32], strides = [1, 1]} : vector<2x96xf32> to vector<2x32xf32>
    %266 = vector.extract_strided_slice %262 {offsets = [0, 32], sizes = [2, 32], strides = [1, 1]} : vector<2x96xf32> to vector<2x32xf32>
    %267 = vector.extract_strided_slice %262 {offsets = [0, 64], sizes = [2, 32], strides = [1, 1]} : vector<2x96xf32> to vector<2x32xf32>
    %268 = arith.mulf %266, %227 : vector<2x32xf32>
    %269 = arith.mulf %265, %264 : vector<2x32xf32>
    %270 = arith.addf %268, %269 : vector<2x32xf32>
    %271 = math.tanh %270 : vector<2x32xf32>
    %272 = arith.mulf %267, %271 : vector<2x32xf32>
    %273 = tpu.concatenate %229, %250 in 1 : vector<2x32xf32>, vector<2x32xf32> -> vector<2x64xf32>
    %274 = arith.truncf %273 : vector<2x64xf32> to vector<2x64xbf16>
    %cst_50 = arith.constant dense<0.000000e+00> : vector<2x128xf32>
    %275 = tpu.matmul %274, %3, %cst_50 {dimension_numbers = #tpu.dot_dimension_numbers<[1], [0], [0], [1], [0, 0, 1, 1], [], []>} : vector<2x64xbf16>, vector<64x128xbf16>, vector<2x128xf32> -> vector<2x128xf32>
    %276 = vector.broadcast %4 : vector<1x128xf32> to vector<2x128xf32>
    %277 = arith.addf %275, %276 : vector<2x128xf32>
    %278 = vector.extract_strided_slice %277 {offsets = [0, 0], sizes = [2, 96], strides = [1, 1]} : vector<2x128xf32> to vector<2x96xf32>
    %279 = arith.negf %278 : vector<2x96xf32>
    %280 = math.exp %279 : vector<2x96xf32>
    %cst_51 = arith.constant 1.000000e+00 : f32
    %281 = vector.broadcast %cst_51 : f32 to vector<2x96xf32>
    %282 = arith.addf %281, %280 : vector<2x96xf32>
    %283 = arith.divf %281, %282 : vector<2x96xf32>
    %284 = vector.extract_strided_slice %277 {offsets = [0, 96], sizes = [2, 32], strides = [1, 1]} : vector<2x128xf32> to vector<2x32xf32>
    %285 = math.tanh %284 : vector<2x32xf32>
    %286 = vector.extract_strided_slice %283 {offsets = [0, 0], sizes = [2, 32], strides = [1, 1]} : vector<2x96xf32> to vector<2x32xf32>
    %287 = vector.extract_strided_slice %283 {offsets = [0, 32], sizes = [2, 32], strides = [1, 1]} : vector<2x96xf32> to vector<2x32xf32>
    %288 = vector.extract_strided_slice %283 {offsets = [0, 64], sizes = [2, 32], strides = [1, 1]} : vector<2x96xf32> to vector<2x32xf32>
    %289 = arith.mulf %287, %248 : vector<2x32xf32>
    %290 = arith.mulf %286, %285 : vector<2x32xf32>
    %291 = arith.addf %289, %290 : vector<2x32xf32>
    %292 = math.tanh %291 : vector<2x32xf32>
    %293 = arith.mulf %288, %292 : vector<2x32xf32>
    %cst_52 = arith.constant 0.000000e+00 : f32
    %294 = vector.broadcast %cst_52 : f32 to vector<2x32xf32>
    %295 = arith.maximumf %293, %294 : vector<2x32xf32>
    %c0_53 = arith.constant 0 : index
    %c160 = arith.constant 160 : index
    %296 = vector.load %arg6[%c0_53, %c160] : memref<2x256xf32, #tpu.memory_space<vmem>>, vector<2x32xf32>
    tpu.vector_store %arg6[%c0_53, %c160], %295 {strides = array<i32>} : memref<2x256xf32, #tpu.memory_space<vmem>>, vector<2x32xf32>,
    %297 = arith.truncf %272 : vector<2x32xf32> to vector<2x32xbf16>
    %cst_54 = arith.constant dense<0.000000e+00> : vector<2x128xf32>
    %298 = tpu.matmul %297, %1, %cst_54 {dimension_numbers = #tpu.dot_dimension_numbers<[1], [0], [0], [1], [0, 0, 1, 1], [], []>} : vector<2x32xbf16>, vector<32x128xbf16>, vector<2x128xf32> -> vector<2x128xf32>
    %299 = arith.addf %10, %298 : vector<2x128xf32>
    %300 = vector.extract_strided_slice %299 {offsets = [0, 0], sizes = [2, 96], strides = [1, 1]} : vector<2x128xf32> to vector<2x96xf32>
    %301 = arith.negf %300 : vector<2x96xf32>
    %302 = math.exp %301 : vector<2x96xf32>
    %cst_55 = arith.constant 1.000000e+00 : f32
    %303 = vector.broadcast %cst_55 : f32 to vector<2x96xf32>
    %304 = arith.addf %303, %302 : vector<2x96xf32>
    %305 = arith.divf %303, %304 : vector<2x96xf32>
    %306 = vector.extract_strided_slice %299 {offsets = [0, 96], sizes = [2, 32], strides = [1, 1]} : vector<2x128xf32> to vector<2x32xf32>
    %307 = math.tanh %306 : vector<2x32xf32>
    %308 = vector.extract_strided_slice %305 {offsets = [0, 0], sizes = [2, 32], strides = [1, 1]} : vector<2x96xf32> to vector<2x32xf32>
    %309 = vector.extract_strided_slice %305 {offsets = [0, 32], sizes = [2, 32], strides = [1, 1]} : vector<2x96xf32> to vector<2x32xf32>
    %310 = vector.extract_strided_slice %305 {offsets = [0, 64], sizes = [2, 32], strides = [1, 1]} : vector<2x96xf32> to vector<2x32xf32>
    %311 = arith.mulf %309, %270 : vector<2x32xf32>
    %312 = arith.mulf %308, %307 : vector<2x32xf32>
    %313 = arith.addf %311, %312 : vector<2x32xf32>
    %314 = math.tanh %313 : vector<2x32xf32>
    %315 = arith.mulf %310, %314 : vector<2x32xf32>
    %316 = tpu.concatenate %272, %293 in 1 : vector<2x32xf32>, vector<2x32xf32> -> vector<2x64xf32>
    %317 = arith.truncf %316 : vector<2x64xf32> to vector<2x64xbf16>
    %cst_56 = arith.constant dense<0.000000e+00> : vector<2x128xf32>
    %318 = tpu.matmul %317, %3, %cst_56 {dimension_numbers = #tpu.dot_dimension_numbers<[1], [0], [0], [1], [0, 0, 1, 1], [], []>} : vector<2x64xbf16>, vector<64x128xbf16>, vector<2x128xf32> -> vector<2x128xf32>
    %319 = vector.broadcast %4 : vector<1x128xf32> to vector<2x128xf32>
    %320 = arith.addf %318, %319 : vector<2x128xf32>
    %321 = vector.extract_strided_slice %320 {offsets = [0, 0], sizes = [2, 96], strides = [1, 1]} : vector<2x128xf32> to vector<2x96xf32>
    %322 = arith.negf %321 : vector<2x96xf32>
    %323 = math.exp %322 : vector<2x96xf32>
    %cst_57 = arith.constant 1.000000e+00 : f32
    %324 = vector.broadcast %cst_57 : f32 to vector<2x96xf32>
    %325 = arith.addf %324, %323 : vector<2x96xf32>
    %326 = arith.divf %324, %325 : vector<2x96xf32>
    %327 = vector.extract_strided_slice %320 {offsets = [0, 96], sizes = [2, 32], strides = [1, 1]} : vector<2x128xf32> to vector<2x32xf32>
    %328 = math.tanh %327 : vector<2x32xf32>
    %329 = vector.extract_strided_slice %326 {offsets = [0, 0], sizes = [2, 32], strides = [1, 1]} : vector<2x96xf32> to vector<2x32xf32>
    %330 = vector.extract_strided_slice %326 {offsets = [0, 32], sizes = [2, 32], strides = [1, 1]} : vector<2x96xf32> to vector<2x32xf32>
    %331 = vector.extract_strided_slice %326 {offsets = [0, 64], sizes = [2, 32], strides = [1, 1]} : vector<2x96xf32> to vector<2x32xf32>
    %332 = arith.mulf %330, %291 : vector<2x32xf32>
    %333 = arith.mulf %329, %328 : vector<2x32xf32>
    %334 = arith.addf %332, %333 : vector<2x32xf32>
    %335 = math.tanh %334 : vector<2x32xf32>
    %336 = arith.mulf %331, %335 : vector<2x32xf32>
    %cst_58 = arith.constant 0.000000e+00 : f32
    %337 = vector.broadcast %cst_58 : f32 to vector<2x32xf32>
    %338 = arith.maximumf %336, %337 : vector<2x32xf32>
    %c0_59 = arith.constant 0 : index
    %c192 = arith.constant 192 : index
    %339 = vector.load %arg6[%c0_59, %c192] : memref<2x256xf32, #tpu.memory_space<vmem>>, vector<2x32xf32>
    tpu.vector_store %arg6[%c0_59, %c192], %338 {strides = array<i32>} : memref<2x256xf32, #tpu.memory_space<vmem>>, vector<2x32xf32>,
    %340 = tpu.concatenate %315, %336 in 1 : vector<2x32xf32>, vector<2x32xf32> -> vector<2x64xf32>
    %341 = arith.truncf %340 : vector<2x64xf32> to vector<2x64xbf16>
    %cst_60 = arith.constant dense<0.000000e+00> : vector<2x128xf32>
    %342 = tpu.matmul %341, %3, %cst_60 {dimension_numbers = #tpu.dot_dimension_numbers<[1], [0], [0], [1], [0, 0, 1, 1], [], []>} : vector<2x64xbf16>, vector<64x128xbf16>, vector<2x128xf32> -> vector<2x128xf32>
    %343 = vector.broadcast %4 : vector<1x128xf32> to vector<2x128xf32>
    %344 = arith.addf %342, %343 : vector<2x128xf32>
    %345 = vector.extract_strided_slice %344 {offsets = [0, 0], sizes = [2, 96], strides = [1, 1]} : vector<2x128xf32> to vector<2x96xf32>
    %346 = arith.negf %345 : vector<2x96xf32>
    %347 = math.exp %346 : vector<2x96xf32>
    %cst_61 = arith.constant 1.000000e+00 : f32
    %348 = vector.broadcast %cst_61 : f32 to vector<2x96xf32>
    %349 = arith.addf %348, %347 : vector<2x96xf32>
    %350 = arith.divf %348, %349 : vector<2x96xf32>
    %351 = vector.extract_strided_slice %344 {offsets = [0, 96], sizes = [2, 32], strides = [1, 1]} : vector<2x128xf32> to vector<2x32xf32>
    %352 = math.tanh %351 : vector<2x32xf32>
    %353 = vector.extract_strided_slice %350 {offsets = [0, 0], sizes = [2, 32], strides = [1, 1]} : vector<2x96xf32> to vector<2x32xf32>
    %354 = vector.extract_strided_slice %350 {offsets = [0, 32], sizes = [2, 32], strides = [1, 1]} : vector<2x96xf32> to vector<2x32xf32>
    %355 = vector.extract_strided_slice %350 {offsets = [0, 64], sizes = [2, 32], strides = [1, 1]} : vector<2x96xf32> to vector<2x32xf32>
    %356 = arith.mulf %354, %334 : vector<2x32xf32>
    %357 = arith.mulf %353, %352 : vector<2x32xf32>
    %358 = arith.addf %356, %357 : vector<2x32xf32>
    %359 = math.tanh %358 : vector<2x32xf32>
    %360 = arith.mulf %355, %359 : vector<2x32xf32>
    %cst_62 = arith.constant 0.000000e+00 : f32
    %361 = vector.broadcast %cst_62 : f32 to vector<2x32xf32>
    %362 = arith.maximumf %360, %361 : vector<2x32xf32>
    %c0_63 = arith.constant 0 : index
    %c224 = arith.constant 224 : index
    %363 = vector.load %arg6[%c0_63, %c224] : memref<2x256xf32, #tpu.memory_space<vmem>>, vector<2x32xf32>
    tpu.vector_store %arg6[%c0_63, %c224], %362 {strides = array<i32>} : memref<2x256xf32, #tpu.memory_space<vmem>>, vector<2x32xf32>,
    return
  }
}

</mosaic_0001>

<llo_original>
// kernel: decoder_rnn_forward.1
$region0: #{decoder_rnn_forward.1}
  #allocation0 [shape = 'u32[]', space=smem, size = 0x4, offset = 0x4, fixed_abs, tag = 'smem constant byte address 0x4 - core index']
  #allocation1 [shape = 'u32[144,128]{1,0:T(1,128)}', space=vmem, size = 0x12000, scoped, tag = 'internal scratch']
  %s0 = inlined_call_operand.vmem [shape: bf16[10,32], index: 0, kind: input, shape index: {}]
  %s1 = inlined_call_operand.vmem [shape: bf16[32,128], index: 1, kind: input, shape index: {}]
  %s2 = inlined_call_operand.vmem [shape: bf16[32,128], index: 2, kind: input, shape index: {}]
  %s3 = inlined_call_operand.vmem [shape: f32[1,128], index: 3, kind: input, shape index: {}]
  %s4 = inlined_call_operand.vmem [shape: bf16[64,128], index: 4, kind: input, shape index: {}]
  %s5 = inlined_call_operand.vmem [shape: f32[1,128], index: 5, kind: input, shape index: {}]
  %s6 = inlined_call_operand.vmem [shape: f32[2,256], index: 6, kind: output, shape index: {}]
  %s7 = sld [smem:[#allocation0]]
  $region34: #{decoder_rnn_forward.1} parent=0
    _
  %s9 = ssub.s32 1, %s7
  %s10 = scalar_select 0, %s9, %s7
  // Predicated region
  $region2: #{decoder_rnn_forward.1} parent=0 // pred_check
    _
  $region3: #{decoder_rnn_forward.1} parent=0 // pred_check_branch
    %12 = sbr.rel (0) target = $region5
  $region4: #{decoder_rnn_forward.1} parent=0 // pred_region
    _
  $region5: #{decoder_rnn_forward.1} parent=0 // pred_fallthru
    _
  // Predicated region
  $region6: #{decoder_rnn_forward.1} parent=0 // pred_check
    _
  $region7: #{decoder_rnn_forward.1} parent=0 // pred_check_branch
    %14 = sbr.rel (0) target = $region9
  $region8: #{decoder_rnn_forward.1} parent=0 // pred_region
    _
  $region9: #{decoder_rnn_forward.1} parent=0 // pred_fallthru
    _
  // Predicated region
  $region10: #{decoder_rnn_forward.1} parent=0 // pred_check
    _
  $region11: #{decoder_rnn_forward.1} parent=0 // pred_check_branch
    %16 = sbr.rel (0) target = $region13
  $region12: #{decoder_rnn_forward.1} parent=0 // pred_region
    _
  $region13: #{decoder_rnn_forward.1} parent=0 // pred_fallthru
    _
  // Predicated region
  $region14: #{decoder_rnn_forward.1} parent=0 // pred_check
    _
  $region15: #{decoder_rnn_forward.1} parent=0 // pred_check_branch
    %18 = sbr.rel (0) target = $region17
  $region16: #{decoder_rnn_forward.1} parent=0 // pred_region
    _
  $region17: #{decoder_rnn_forward.1} parent=0 // pred_fallthru
    _
  // Predicated region
  $region18: #{decoder_rnn_forward.1} parent=0 // pred_check
    _
  $region19: #{decoder_rnn_forward.1} parent=0 // pred_check_branch
    %20 = sbr.rel (0) target = $region21
  $region20: #{decoder_rnn_forward.1} parent=0 // pred_region
    _
  $region21: #{decoder_rnn_forward.1} parent=0 // pred_fallthru
    _
  // Predicated region
  $region22: #{decoder_rnn_forward.1} parent=0 // pred_check
    _
  $region23: #{decoder_rnn_forward.1} parent=0 // pred_check_branch
    %22 = sbr.rel (0) target = $region25
  $region24: #{decoder_rnn_forward.1} parent=0 // pred_region
    _
  $region25: #{decoder_rnn_forward.1} parent=0 // pred_fallthru
    _
  %v24 = vld [vmem:[%s1] sm:$0xf]
  %v25 = vld [vmem:[%s1 + $0x4] sm:$0xf]
  %v26 = vld [vmem:[%s1 + $0x8] sm:$0xf]
  %v27 = vld [vmem:[%s1 + $0xc] sm:$0xf]
  %v28 = vld [vmem:[%s2] sm:$0xf]
  %v29 = vld [vmem:[%s2 + $0x4] sm:$0xf]
  %v30 = vld [vmem:[%s2 + $0x8] sm:$0xf]
  %v31 = vld [vmem:[%s2 + $0xc] sm:$0xf]
  %v32 = vld [vmem:[%s3] sm:$0x1]
  %v33 = vld [vmem:[%s4] sm:$0xf]
  %v34 = vld [vmem:[%s4 + $0x4] sm:$0xf]
  %v35 = vld [vmem:[%s4 + $0x8] sm:$0xf]
  %v36 = vld [vmem:[%s4 + $0xc] sm:$0xf]
  %v37 = vld [vmem:[%s4 + $0x10] sm:$0xf]
  %v38 = vld [vmem:[%s4 + $0x14] sm:$0xf]
  %v39 = vld [vmem:[%s4 + $0x18] sm:$0xf]
  %v40 = vld [vmem:[%s4 + $0x1c] sm:$0xf]
  %v41 = vld [vmem:[%s5] sm:$0x1]
  %v42 = vld [vmem:[%s0] sm:$0xf]
  %v43 = vld [vmem:[%s0 + $0x4] sm:$0x1]
  %v45 = vlaneseq
  %v46 = vshrl.u32 %v45, 7
  %v47 = vsub.s32 0, %v46
  %v48 = vrot.slane %v32, %v47
  %v52 = vunpack.c.l.b16 %v42
  %v53 = vunpack.c.l.b16 %v43
  %v54 = vpack.c.b16 %v53, %v52
  %v59 = vunpack.c.l.b16 %v24
  %v60 = vunpack.c.l.b16 %v25
  %v61 = vunpack.c.l.b16 %v26
  %v62 = vunpack.c.l.b16 %v27
  %v63 = vpack.c.b16 %v60, %v59
  %v64 = vpack.c.b16 %v62, %v61
  %vm67 = vcmask 261120
  %v69 = vsel %vm67, %v54, 0
  %71 = vmatprep.subr.bf16.mxu0 0
  %72 = vmatpush1.bf16.msra.mxu0 %v63
  %73 = vmatprep.subr.bf16.mxu0 0
  %74 = vmatpush1.bf16.msra.mxu0 %v64
  %75 = vmatprep.subr.bf16.mxu0 0
  %76 = vmatpush1.bf16.msra.mxu0 0
  %77 = vmatprep.subr.bf16.mxu0 0
  %78 = vmatpush1.bf16.msra.mxu0 0
  %79 = vmatprep.subr.bf16.mxu0 0
  %80 = vmatpush1.bf16.msra.mxu0 0
  %81 = vmatprep.subr.bf16.mxu0 0
  %82 = vmatpush1.bf16.msra.mxu0 0
  %83 = vmatprep.subr.bf16.mxu0 0
  %84 = vmatpush1.bf16.msra.mxu0 0
  %85 = vmatprep.subr.bf16.mxu0 0
  %86 = vmatpush1.bf16.msra.mxu0 0
  %87 = vmatprep.subr.bf16.mxu0 0
  %88 = vmatpush1.bf16.msra.mxu0 0
  %89 = vmatprep.subr.bf16.mxu0 0
  %90 = vmatpush1.bf16.msra.mxu0 0
  %91 = vmatprep.subr.bf16.mxu0 0
  %92 = vmatpush1.bf16.msra.mxu0 0
  %93 = vmatprep.subr.bf16.mxu0 0
  %94 = vmatpush1.bf16.msra.mxu0 0
  %95 = vmatprep.subr.bf16.mxu0 0
  %96 = vmatpush1.bf16.msra.mxu0 0
  %97 = vmatprep.subr.bf16.mxu0 0
  %98 = vmatpush1.bf16.msra.mxu0 0
  %99 = vmatprep.subr.bf16.mxu0 0
  %100 = vmatpush1.bf16.msra.mxu0 0
  %101 = vmatprep.subr.bf16.mxu0 0
  %102 = vmatpush1.bf16.msra.mxu0 0
  %103 = vmatprep.mubr.bf16.mxu0 0
  %104 = vmatmul.mubr.bf16.gmra.mrb[0].mxu0 %v69
  %v105 = vpop.f32.mrb[0].mxu0
  %v106 = vadd.f32 %v48, %v105
  %v107 = vpop.f32.mrb[0].mxu0
  %v108 = vpop.f32.mrb[0].mxu0
  %v109 = vadd.f32 %v48, %v108
  %v110 = vpop.f32.mrb[0].mxu0
  %111 = vdwg.mxu0
  %v116 = vunpack.c.l.b16 %v28
  %v117 = vunpack.c.l.b16 %v29
  %v118 = vunpack.c.l.b16 %v30
  %v119 = vunpack.c.l.b16 %v31
  %v120 = vpack.c.b16 %v117, %v116
  %v121 = vpack.c.b16 %v119, %v118
  %v125 = vsel %vm67, 0, 0
  %127 = vmatprep.subr.bf16.mxu0 0
  %128 = vmatpush1.bf16.msra.mxu0 %v120
  %129 = vmatprep.subr.bf16.mxu0 0
  %130 = vmatpush1.bf16.msra.mxu0 %v121
  %131 = vmatprep.subr.bf16.mxu0 0
  %132 = vmatpush1.bf16.msra.mxu0 0
  %133 = vmatprep.subr.bf16.mxu0 0
  %134 = vmatpush1.bf16.msra.mxu0 0
  %135 = vmatprep.subr.bf16.mxu0 0
  %136 = vmatpush1.bf16.msra.mxu0 0
  %137 = vmatprep.subr.bf16.mxu0 0
  %138 = vmatpush1.bf16.msra.mxu0 0
  %139 = vmatprep.subr.bf16.mxu0 0
  %140 = vmatpush1.bf16.msra.mxu0 0
  %141 = vmatprep.subr.bf16.mxu0 0
  %142 = vmatpush1.bf16.msra.mxu0 0
  %143 = vmatprep.subr.bf16.mxu0 0
  %144 = vmatpush1.bf16.msra.mxu0 0
  %145 = vmatprep.subr.bf16.mxu0 0
  %146 = vmatpush1.bf16.msra.mxu0 0
  %147 = vmatprep.subr.bf16.mxu0 0
  %148 = vmatpush1.bf16.msra.mxu0 0
  %149 = vmatprep.subr.bf16.mxu0 0
  %150 = vmatpush1.bf16.msra.mxu0 0
  %151 = vmatprep.subr.bf16.mxu0 0
  %152 = vmatpush1.bf16.msra.mxu0 0
  %153 = vmatprep.subr.bf16.mxu0 0
  %154 = vmatpush1.bf16.msra.mxu0 0
  %155 = vmatprep.subr.bf16.mxu0 0
  %156 = vmatpush1.bf16.msra.mxu0 0
  %157 = vmatprep.subr.bf16.mxu0 0
  %158 = vmatpush1.bf16.msra.mxu0 0
  %159 = vmatprep.mubr.bf16.mxu0 0
  %160 = vmatmul.mubr.bf16.gmra.mrb[0].mxu0 %v125
  %v161 = vpop.f32.mrb[0].mxu0
  %v162 = vadd.f32 0.0, %v161
  %v163 = vpop.f32.mrb[0].mxu0
  %v164 = vpop.f32.mrb[0].mxu0
  %v165 = vpop.f32.mrb[0].mxu0
  %166 = vdwg.mxu0
  %v167 = vadd.f32 %v106, %v162
  %v168 = vxor.u32 %v167, 2147483648
  %v169 = vmul.f32 %v168, 1.442695
  %v170 = vpow.pop %v169
  %v171 = vadd.f32 %v170, 1.0
  %v172 = vrcp.pop %v171
  %v173 = vmul.f32 1.0, %v172
  %v174 = vtanh.pop %v167
  %v175 = vmul.f32 %v173, 0.0
  %177 = vrot.lane.b32.xlu0 %v174, 32
  %v178 = vpop.permute.xlu0 %177
  %v180 = vmul.f32 %v173, %v178
  %182 = vrot.lane.b32.xlu0 %v180, 32
  %v183 = vpop.permute.xlu0 %182
  %v185 = vadd.f32 %v175, %v183
  %v186 = vtanh.pop %v185
  %188 = vrot.lane.b32.xlu0 %v186, 32
  %v189 = vpop.permute.xlu0 %188
  %v191 = vmul.f32 %v173, %v189
  %v192 = vpack.c.bf16 %v191, %v191
  %194 = vrot.lane.b32.xlu0 %v192, 64
  %v195 = vpop.permute.xlu0 %194
  %v197 = vsel %vm67, %v195, 0
  %199 = vmatprep.subr.bf16.mxu0 0
  %200 = vmatpush1.bf16.msra.mxu0 %v120
  %201 = vmatprep.subr.bf16.mxu0 0
  %202 = vmatpush1.bf16.msra.mxu0 %v121
  %203 = vmatprep.subr.bf16.mxu0 0
  %204 = vmatpush1.bf16.msra.mxu0 0
  %205 = vmatprep.subr.bf16.mxu0 0
  %206 = vmatpush1.bf16.msra.mxu0 0
  %207 = vmatprep.subr.bf16.mxu0 0
  %208 = vmatpush1.bf16.msra.mxu0 0
  %209 = vmatprep.subr.bf16.mxu0 0
  %210 = vmatpush1.bf16.msra.mxu0 0
  %211 = vmatprep.subr.bf16.mxu0 0
  %212 = vmatpush1.bf16.msra.mxu0 0
  %213 = vmatprep.subr.bf16.mxu0 0
  %214 = vmatpush1.bf16.msra.mxu0 0
  %215 = vmatprep.subr.bf16.mxu0 0
  %216 = vmatpush1.bf16.msra.mxu0 0
  %217 = vmatprep.subr.bf16.mxu0 0
  %218 = vmatpush1.bf16.msra.mxu0 0
  %219 = vmatprep.subr.bf16.mxu0 0
  %220 = vmatpush1.bf16.msra.mxu0 0
  %221 = vmatprep.subr.bf16.mxu0 0
  %222 = vmatpush1.bf16.msra.mxu0 0
  %223 = vmatprep.subr.bf16.mxu0 0
  %224 = vmatpush1.bf16.msra.mxu0 0
  %225 = vmatprep.subr.bf16.mxu0 0
  %226 = vmatpush1.bf16.msra.mxu0 0
  %227 = vmatprep.subr.bf16.mxu0 0
  %228 = vmatpush1.bf16.msra.mxu0 0
  %229 = vmatprep.subr.bf16.mxu0 0
  %230 = vmatpush1.bf16.msra.mxu0 0
  %231 = vmatprep.mubr.bf16.mxu0 0
  %232 = vmatmul.mubr.bf16.gmra.mrb[0].mxu0 %v197
  %v233 = vpop.f32.mrb[0].mxu0
  %v234 = vadd.f32 0.0, %v233
  %v235 = vpop.f32.mrb[0].mxu0
  %v236 = vpop.f32.mrb[0].mxu0
  %v237 = vpop.f32.mrb[0].mxu0
  %238 = vdwg.mxu0
  %v240 = vrot.slane %v234, 6
  %v242 = vadd.f32 %v106, %v240
  %v243 = vxor.u32 %v242, 2147483648
  %v244 = vmul.f32 %v243, 1.442695
  %v245 = vpow.pop %v244
  %v246 = vadd.f32 %v245, 1.0
  %v247 = vrcp.pop %v246
  %v248 = vmul.f32 1.0, %v247
  %v249 = vtanh.pop %v242
  %v251 = vrot.slane %v185, 6
  %v253 = vmul.f32 %v248, %v251
  %255 = vrot.lane.b32.xlu0 %v249, 32
  %v256 = vpop.permute.xlu0 %255
  %v258 = vmul.f32 %v248, %v256
  %260 = vrot.lane.b32.xlu0 %v258, 32
  %v261 = vpop.permute.xlu0 %260
  %v263 = vadd.f32 %v253, %v261
  %v264 = vtanh.pop %v263
  %266 = vrot.lane.b32.xlu0 %v264, 32
  %v267 = vpop.permute.xlu0 %266
  %v269 = vmul.f32 %v248, %v267
  %271 = vrot.lane.b32.xlu0 %v191, 64
  %v272 = vpop.permute.xlu0 %271
  %v274 = vsel %vm67, %v272, 0.0
  %v275 = vpack.c.bf16 %v274, %v274
  %v277 = vlaneseq
  %v278 = vshrl.u32 %v277, 7
  %v279 = vsub.s32 0, %v278
  %v280 = vrot.slane %v41, %v279
  %v290 = vunpack.c.l.b16 %v33
  %v291 = vunpack.c.l.b16 %v34
  %v292 = vunpack.c.l.b16 %v35
  %v293 = vunpack.c.l.b16 %v36
  %v294 = vunpack.c.l.b16 %v37
  %v295 = vunpack.c.l.b16 %v38
  %v296 = vunpack.c.l.b16 %v39
  %v297 = vunpack.c.l.b16 %v40
  %v298 = vpack.c.b16 %v291, %v290
  %v299 = vpack.c.b16 %v293, %v292
  %v300 = vpack.c.b16 %v295, %v294
  %v301 = vpack.c.b16 %v297, %v296
  %vm306 = vcmask 523264
  %v308 = vsel %vm306, %v275, 0
  %310 = vmatprep.subr.bf16.mxu0 0
  %311 = vmatpush1.bf16.msra.mxu0 %v298
  %312 = vmatprep.subr.bf16.mxu0 0
  %313 = vmatpush1.bf16.msra.mxu0 %v299
  %314 = vmatprep.subr.bf16.mxu0 0
  %315 = vmatpush1.bf16.msra.mxu0 %v300
  %316 = vmatprep.subr.bf16.mxu0 0
  %317 = vmatpush1.bf16.msra.mxu0 %v301
  %318 = vmatprep.subr.bf16.mxu0 0
  %319 = vmatpush1.bf16.msra.mxu0 0
  %320 = vmatprep.subr.bf16.mxu0 0
  %321 = vmatpush1.bf16.msra.mxu0 0
  %322 = vmatprep.subr.bf16.mxu0 0
  %323 = vmatpush1.bf16.msra.mxu0 0
  %324 = vmatprep.subr.bf16.mxu0 0
  %325 = vmatpush1.bf16.msra.mxu0 0
  %326 = vmatprep.subr.bf16.mxu0 0
  %327 = vmatpush1.bf16.msra.mxu0 0
  %328 = vmatprep.subr.bf16.mxu0 0
  %329 = vmatpush1.bf16.msra.mxu0 0
  %330 = vmatprep.subr.bf16.mxu0 0
  %331 = vmatpush1.bf16.msra.mxu0 0
  %332 = vmatprep.subr.bf16.mxu0 0
  %333 = vmatpush1.bf16.msra.mxu0 0
  %334 = vmatprep.subr.bf16.mxu0 0
  %335 = vmatpush1.bf16.msra.mxu0 0
  %336 = vmatprep.subr.bf16.mxu0 0
  %337 = vmatpush1.bf16.msra.mxu0 0
  %338 = vmatprep.subr.bf16.mxu0 0
  %339 = vmatpush1.bf16.msra.mxu0 0
  %340 = vmatprep.subr.bf16.mxu0 0
  %341 = vmatpush1.bf16.msra.mxu0 0
  %342 = vmatprep.mubr.bf16.mxu0 0
  %343 = vmatmul.mubr.bf16.gmra.mrb[0].mxu0 %v308
  %v344 = vpop.f32.mrb[0].mxu0
  %v345 = vadd.f32 %v280, %v344
  %v346 = vpop.f32.mrb[0].mxu0
  %v347 = vpop.f32.mrb[0].mxu0
  %v348 = vpop.f32.mrb[0].mxu0
  %349 = vdwg.mxu0
  %v350 = vxor.u32 %v345, 2147483648
  %v351 = vmul.f32 %v350, 1.442695
  %v352 = vpow.pop %v351
  %v353 = vadd.f32 %v352, 1.0
  %v354 = vrcp.pop %v353
  %v355 = vmul.f32 1.0, %v354
  %v356 = vtanh.pop %v345
  %v357 = vmul.f32 %v355, 0.0
  %359 = vrot.lane.b32.xlu0 %v356, 32
  %v360 = vpop.permute.xlu0 %359
  %v362 = vmul.f32 %v355, %v360
  %364 = vrot.lane.b32.xlu0 %v362, 32
  %v365 = vpop.permute.xlu0 %364
  %v367 = vadd.f32 %v357, %v365
  %v368 = vtanh.pop %v367
  %370 = vrot.lane.b32.xlu0 %v368, 32
  %v371 = vpop.permute.xlu0 %370
  %v373 = vmul.f32 %v355, %v371
  %v374 = vmax.f32 %v373, 0.0
  %v377 = vunpack.c.l.s4 1983009808
  %v378 = vunpack.c.0.s8 %v377
  %v379 = vlaneseq
  %v380 = vshrl.u32 %v379, 7
  %v381 = vsub.s32 %v378, %v380
  %v382 = vrot.slane %v374, %v381
  %383 = vrot.lane.b32.xlu0 %v382, 64
  %v384 = vpop.permute.xlu0 %383
  %vm386 = vcmask 254976
  %387 = vst.msk [vmem:[%s6] sm:$0x3] %vm386, %v384
  %v388 = vpack.c.bf16 %v269, %v269
  %v390 = vrot.slane %v388, 1
  %391 = vrot.lane.b32.xlu0 %v390, 64
  %v392 = vpop.permute.xlu0 %391
  %v394 = vsel %vm67, %v392, 0
  %396 = vmatprep.subr.bf16.mxu0 0
  %397 = vmatpush1.bf16.msra.mxu0 %v120
  %398 = vmatprep.subr.bf16.mxu0 0
  %399 = vmatpush1.bf16.msra.mxu0 %v121
  %400 = vmatprep.subr.bf16.mxu0 0
  %401 = vmatpush1.bf16.msra.mxu0 0
  %402 = vmatprep.subr.bf16.mxu0 0
  %403 = vmatpush1.bf16.msra.mxu0 0
  %404 = vmatprep.subr.bf16.mxu0 0
  %405 = vmatpush1.bf16.msra.mxu0 0
  %406 = vmatprep.subr.bf16.mxu0 0
  %407 = vmatpush1.bf16.msra.mxu0 0
  %408 = vmatprep.subr.bf16.mxu0 0
  %409 = vmatpush1.bf16.msra.mxu0 0
  %410 = vmatprep.subr.bf16.mxu0 0
  %411 = vmatpush1.bf16.msra.mxu0 0
  %412 = vmatprep.subr.bf16.mxu0 0
  %413 = vmatpush1.bf16.msra.mxu0 0
  %414 = vmatprep.subr.bf16.mxu0 0
  %415 = vmatpush1.bf16.msra.mxu0 0
  %416 = vmatprep.subr.bf16.mxu0 0
  %417 = vmatpush1.bf16.msra.mxu0 0
  %418 = vmatprep.subr.bf16.mxu0 0
  %419 = vmatpush1.bf16.msra.mxu0 0
  %420 = vmatprep.subr.bf16.mxu0 0
  %421 = vmatpush1.bf16.msra.mxu0 0
  %422 = vmatprep.subr.bf16.mxu0 0
  %423 = vmatpush1.bf16.msra.mxu0 0
  %424 = vmatprep.subr.bf16.mxu0 0
  %425 = vmatpush1.bf16.msra.mxu0 0
  %426 = vmatprep.subr.bf16.mxu0 0
  %427 = vmatpush1.bf16.msra.mxu0 0
  %428 = vmatprep.mubr.bf16.mxu0 0
  %429 = vmatmul.mubr.bf16.gmra.mrb[0].mxu0 %v394
  %v430 = vpop.f32.mrb[0].mxu0
  %v431 = vadd.f32 0.0, %v430
  %v432 = vpop.f32.mrb[0].mxu0
  %v433 = vpop.f32.mrb[0].mxu0
  %v434 = vpop.f32.mrb[0].mxu0
  %435 = vdwg.mxu0
  %v437 = vrot.slane %v431, 4
  %v439 = vadd.f32 %v106, %v437
  %v440 = vxor.u32 %v439, 2147483648
  %v441 = vmul.f32 %v440, 1.442695
  %v442 = vpow.pop %v441
  %v443 = vadd.f32 %v442, 1.0
  %v444 = vrcp.pop %v443
  %v445 = vmul.f32 1.0, %v444
  %v446 = vtanh.pop %v439
  %v448 = vrot.slane %v263, 6
  %v450 = vmul.f32 %v445, %v448
  %452 = vrot.lane.b32.xlu0 %v446, 32
  %v453 = vpop.permute.xlu0 %452
  %v455 = vmul.f32 %v445, %v453
  %457 = vrot.lane.b32.xlu0 %v455, 32
  %v458 = vpop.permute.xlu0 %457
  %v460 = vadd.f32 %v450, %v458
  %v461 = vtanh.pop %v460
  %463 = vrot.lane.b32.xlu0 %v461, 32
  %v464 = vpop.permute.xlu0 %463
  %v466 = vmul.f32 %v445, %v464
  %468 = vrot.lane.b32.xlu0 %v269, 64
  %v469 = vpop.permute.xlu0 %468
  %v472 = vrot.slane %v373, 6
  %473 = vrot.lane.b32.xlu0 %v472, 96
  %v474 = vpop.permute.xlu0 %473
  %v476 = vsel %vm67, %v469, %v474
  %v477 = vpack.c.bf16 %v476, %v476
  %v479 = vrot.slane %v477, 1
  %v481 = vsel %vm306, %v479, 0
  %483 = vmatprep.subr.bf16.mxu0 0
  %484 = vmatpush1.bf16.msra.mxu0 %v298
  %485 = vmatprep.subr.bf16.mxu0 0
  %486 = vmatpush1.bf16.msra.mxu0 %v299
  %487 = vmatprep.subr.bf16.mxu0 0
  %488 = vmatpush1.bf16.msra.mxu0 %v300
  %489 = vmatprep.subr.bf16.mxu0 0
  %490 = vmatpush1.bf16.msra.mxu0 %v301
  %491 = vmatprep.subr.bf16.mxu0 0
  %492 = vmatpush1.bf16.msra.mxu0 0
  %493 = vmatprep.subr.bf16.mxu0 0
  %494 = vmatpush1.bf16.msra.mxu0 0
  %495 = vmatprep.subr.bf16.mxu0 0
  %496 = vmatpush1.bf16.msra.mxu0 0
  %497 = vmatprep.subr.bf16.mxu0 0
  %498 = vmatpush1.bf16.msra.mxu0 0
  %499 = vmatprep.subr.bf16.mxu0 0
  %500 = vmatpush1.bf16.msra.mxu0 0
  %501 = vmatprep.subr.bf16.mxu0 0
  %502 = vmatpush1.bf16.msra.mxu0 0
  %503 = vmatprep.subr.bf16.mxu0 0
  %504 = vmatpush1.bf16.msra.mxu0 0
  %505 = vmatprep.subr.bf16.mxu0 0
  %506 = vmatpush1.bf16.msra.mxu0 0
  %507 = vmatprep.subr.bf16.mxu0 0
  %508 = vmatpush1.bf16.msra.mxu0 0
  %509 = vmatprep.subr.bf16.mxu0 0
  %510 = vmatpush1.bf16.msra.mxu0 0
  %511 = vmatprep.subr.bf16.mxu0 0
  %512 = vmatpush1.bf16.msra.mxu0 0
  %513 = vmatprep.subr.bf16.mxu0 0
  %514 = vmatpush1.bf16.msra.mxu0 0
  %515 = vmatprep.mubr.bf16.mxu0 0
  %516 = vmatmul.mubr.bf16.gmra.mrb[0].mxu0 %v481
  %v517 = vpop.f32.mrb[0].mxu0
  %v518 = vadd.f32 %v280, %v517
  %v519 = vpop.f32.mrb[0].mxu0
  %v520 = vpop.f32.mrb[0].mxu0
  %v521 = vpop.f32.mrb[0].mxu0
  %522 = vdwg.mxu0
  %v523 = vxor.u32 %v518, 2147483648
  %v524 = vmul.f32 %v523, 1.442695
  %v525 = vpow.pop %v524
  %v526 = vadd.f32 %v525, 1.0
  %v527 = vrcp.pop %v526
  %v528 = vmul.f32 1.0, %v527
  %v529 = vtanh.pop %v518
  %v530 = vmul.f32 %v528, %v367
  %532 = vrot.lane.b32.xlu0 %v529, 32
  %v533 = vpop.permute.xlu0 %532
  %v535 = vmul.f32 %v528, %v533
  %537 = vrot.lane.b32.xlu0 %v535, 32
  %v538 = vpop.permute.xlu0 %537
  %v540 = vadd.f32 %v530, %v538
  %v541 = vtanh.pop %v540
  %543 = vrot.lane.b32.xlu0 %v541, 32
  %v544 = vpop.permute.xlu0 %543
  %v546 = vmul.f32 %v528, %v544
  %v547 = vmax.f32 %v546, 0.0
  %v550 = vunpack.c.l.s4 1983009808
  %v551 = vunpack.c.0.s8 %v550
  %v552 = vlaneseq
  %v553 = vshrl.u32 %v552, 7
  %v554 = vsub.s32 %v551, %v553
  %v555 = vrot.slane %v547, %v554
  %556 = vrot.lane.b32.xlu0 %v555, 96
  %v557 = vpop.permute.xlu0 %556
  %vm559 = vcmask 517376
  %560 = vst.msk [vmem:[%s6] sm:$0x3] %vm559, %v557
  %v561 = vpack.c.bf16 %v466, %v466
  %v563 = vrot.slane %v561, 2
  %564 = vrot.lane.b32.xlu0 %v563, 64
  %v565 = vpop.permute.xlu0 %564
  %v567 = vsel %vm67, %v565, 0
  %569 = vmatprep.subr.bf16.mxu0 0
  %570 = vmatpush1.bf16.msra.mxu0 %v120
  %571 = vmatprep.subr.bf16.mxu0 0
  %572 = vmatpush1.bf16.msra.mxu0 %v121
  %573 = vmatprep.subr.bf16.mxu0 0
  %574 = vmatpush1.bf16.msra.mxu0 0
  %575 = vmatprep.subr.bf16.mxu0 0
  %576 = vmatpush1.bf16.msra.mxu0 0
  %577 = vmatprep.subr.bf16.mxu0 0
  %578 = vmatpush1.bf16.msra.mxu0 0
  %579 = vmatprep.subr.bf16.mxu0 0
  %580 = vmatpush1.bf16.msra.mxu0 0
  %581 = vmatprep.subr.bf16.mxu0 0
  %582 = vmatpush1.bf16.msra.mxu0 0
  %583 = vmatprep.subr.bf16.mxu0 0
  %584 = vmatpush1.bf16.msra.mxu0 0
  %585 = vmatprep.subr.bf16.mxu0 0
  %586 = vmatpush1.bf16.msra.mxu0 0
  %587 = vmatprep.subr.bf16.mxu0 0
  %588 = vmatpush1.bf16.msra.mxu0 0
  %589 = vmatprep.subr.bf16.mxu0 0
  %590 = vmatpush1.bf16.msra.mxu0 0
  %591 = vmatprep.subr.bf16.mxu0 0
  %592 = vmatpush1.bf16.msra.mxu0 0
  %593 = vmatprep.subr.bf16.mxu0 0
  %594 = vmatpush1.bf16.msra.mxu0 0
  %595 = vmatprep.subr.bf16.mxu0 0
  %596 = vmatpush1.bf16.msra.mxu0 0
  %597 = vmatprep.subr.bf16.mxu0 0
  %598 = vmatpush1.bf16.msra.mxu0 0
  %599 = vmatprep.subr.bf16.mxu0 0
  %600 = vmatpush1.bf16.msra.mxu0 0
  %601 = vmatprep.mubr.bf16.mxu0 0
  %602 = vmatmul.mubr.bf16.gmra.mrb[0].mxu0 %v567
  %v603 = vpop.f32.mrb[0].mxu0
  %v604 = vadd.f32 0.0, %v603
  %v605 = vpop.f32.mrb[0].mxu0
  %v606 = vpop.f32.mrb[0].mxu0
  %v607 = vpop.f32.mrb[0].mxu0
  %608 = vdwg.mxu0
  %v610 = vrot.slane %v604, 2
  %v612 = vadd.f32 %v106, %v610
  %v613 = vxor.u32 %v612, 2147483648
  %v614 = vmul.f32 %v613, 1.442695
  %v615 = vpow.pop %v614
  %v616 = vadd.f32 %v615, 1.0
  %v617 = vrcp.pop %v616
  %v618 = vmul.f32 1.0, %v617
  %v619 = vtanh.pop %v612
  %v621 = vrot.slane %v460, 6
  %v623 = vmul.f32 %v618, %v621
  %625 = vrot.lane.b32.xlu0 %v619, 32
  %v626 = vpop.permute.xlu0 %625
  %v628 = vmul.f32 %v618, %v626
  %630 = vrot.lane.b32.xlu0 %v628, 32
  %v631 = vpop.permute.xlu0 %630
  %v633 = vadd.f32 %v623, %v631
  %v634 = vtanh.pop %v633
  %636 = vrot.lane.b32.xlu0 %v634, 32
  %v637 = vpop.permute.xlu0 %636
  %v639 = vmul.f32 %v618, %v637
  %641 = vrot.lane.b32.xlu0 %v466, 64
  %v642 = vpop.permute.xlu0 %641
  %v645 = vrot.slane %v546, 4
  %646 = vrot.lane.b32.xlu0 %v645, 96
  %v647 = vpop.permute.xlu0 %646
  %v649 = vsel %vm67, %v642, %v647
  %v650 = vpack.c.bf16 %v649, %v649
  %v652 = vrot.slane %v650, 2
  %v654 = vsel %vm306, %v652, 0
  %656 = vmatprep.subr.bf16.mxu0 0
  %657 = vmatpush1.bf16.msra.mxu0 %v298
  %658 = vmatprep.subr.bf16.mxu0 0
  %659 = vmatpush1.bf16.msra.mxu0 %v299
  %660 = vmatprep.subr.bf16.mxu0 0
  %661 = vmatpush1.bf16.msra.mxu0 %v300
  %662 = vmatprep.subr.bf16.mxu0 0
  %663 = vmatpush1.bf16.msra.mxu0 %v301
  %664 = vmatprep.subr.bf16.mxu0 0
  %665 = vmatpush1.bf16.msra.mxu0 0
  %666 = vmatprep.subr.bf16.mxu0 0
  %667 = vmatpush1.bf16.msra.mxu0 0
  %668 = vmatprep.subr.bf16.mxu0 0
  %669 = vmatpush1.bf16.msra.mxu0 0
  %670 = vmatprep.subr.bf16.mxu0 0
  %671 = vmatpush1.bf16.msra.mxu0 0
  %672 = vmatprep.subr.bf16.mxu0 0
  %673 = vmatpush1.bf16.msra.mxu0 0
  %674 = vmatprep.subr.bf16.mxu0 0
  %675 = vmatpush1.bf16.msra.mxu0 0
  %676 = vmatprep.subr.bf16.mxu0 0
  %677 = vmatpush1.bf16.msra.mxu0 0
  %678 = vmatprep.subr.bf16.mxu0 0
  %679 = vmatpush1.bf16.msra.mxu0 0
  %680 = vmatprep.subr.bf16.mxu0 0
  %681 = vmatpush1.bf16.msra.mxu0 0
  %682 = vmatprep.subr.bf16.mxu0 0
  %683 = vmatpush1.bf16.msra.mxu0 0
  %684 = vmatprep.subr.bf16.mxu0 0
  %685 = vmatpush1.bf16.msra.mxu0 0
  %686 = vmatprep.subr.bf16.mxu0 0
  %687 = vmatpush1.bf16.msra.mxu0 0
  %688 = vmatprep.mubr.bf16.mxu0 0
  %689 = vmatmul.mubr.bf16.gmra.mrb[0].mxu0 %v654
  %v690 = vpop.f32.mrb[0].mxu0
  %v691 = vadd.f32 %v280, %v690
  %v692 = vpop.f32.mrb[0].mxu0
  %v693 = vpop.f32.mrb[0].mxu0
  %v694 = vpop.f32.mrb[0].mxu0
  %695 = vdwg.mxu0
  %v696 = vxor.u32 %v691, 2147483648
  %v697 = vmul.f32 %v696, 1.442695
  %v698 = vpow.pop %v697
  %v699 = vadd.f32 %v698, 1.0
  %v700 = vrcp.pop %v699
  %v701 = vmul.f32 1.0, %v700
  %v702 = vtanh.pop %v691
  %v703 = vmul.f32 %v701, %v540
  %705 = vrot.lane.b32.xlu0 %v702, 32
  %v706 = vpop.permute.xlu0 %705
  %v708 = vmul.f32 %v701, %v706
  %710 = vrot.lane.b32.xlu0 %v708, 32
  %v711 = vpop.permute.xlu0 %710
  %v713 = vadd.f32 %v703, %v711
  %v714 = vtanh.pop %v713
  %716 = vrot.lane.b32.xlu0 %v714, 32
  %v717 = vpop.permute.xlu0 %716
  %v719 = vmul.f32 %v701, %v717
  %v720 = vmax.f32 %v719, 0.0
  %vm721 = vcmask 779776
  %722 = vst.msk [vmem:[%s6] sm:$0x3] %vm721, %v720
  %v723 = vpack.c.bf16 %v639, %v639
  %v725 = vrot.slane %v723, 3
  %726 = vrot.lane.b32.xlu0 %v725, 64
  %v727 = vpop.permute.xlu0 %726
  %v729 = vsel %vm67, %v727, 0
  %731 = vmatprep.subr.bf16.mxu0 0
  %732 = vmatpush1.bf16.msra.mxu0 %v120
  %733 = vmatprep.subr.bf16.mxu0 0
  %734 = vmatpush1.bf16.msra.mxu0 %v121
  %735 = vmatprep.subr.bf16.mxu0 0
  %736 = vmatpush1.bf16.msra.mxu0 0
  %737 = vmatprep.subr.bf16.mxu0 0
  %738 = vmatpush1.bf16.msra.mxu0 0
  %739 = vmatprep.subr.bf16.mxu0 0
  %740 = vmatpush1.bf16.msra.mxu0 0
  %741 = vmatprep.subr.bf16.mxu0 0
  %742 = vmatpush1.bf16.msra.mxu0 0
  %743 = vmatprep.subr.bf16.mxu0 0
  %744 = vmatpush1.bf16.msra.mxu0 0
  %745 = vmatprep.subr.bf16.mxu0 0
  %746 = vmatpush1.bf16.msra.mxu0 0
  %747 = vmatprep.subr.bf16.mxu0 0
  %748 = vmatpush1.bf16.msra.mxu0 0
  %749 = vmatprep.subr.bf16.mxu0 0
  %750 = vmatpush1.bf16.msra.mxu0 0
  %751 = vmatprep.subr.bf16.mxu0 0
  %752 = vmatpush1.bf16.msra.mxu0 0
  %753 = vmatprep.subr.bf16.mxu0 0
  %754 = vmatpush1.bf16.msra.mxu0 0
  %755 = vmatprep.subr.bf16.mxu0 0
  %756 = vmatpush1.bf16.msra.mxu0 0
  %757 = vmatprep.subr.bf16.mxu0 0
  %758 = vmatpush1.bf16.msra.mxu0 0
  %759 = vmatprep.subr.bf16.mxu0 0
  %760 = vmatpush1.bf16.msra.mxu0 0
  %761 = vmatprep.subr.bf16.mxu0 0
  %762 = vmatpush1.bf16.msra.mxu0 0
  %763 = vmatprep.mubr.bf16.mxu0 0
  %764 = vmatmul.mubr.bf16.gmra.mrb[0].mxu0 %v729
  %v765 = vpop.f32.mrb[0].mxu0
  %v766 = vadd.f32 0.0, %v765
  %v767 = vpop.f32.mrb[0].mxu0
  %v768 = vpop.f32.mrb[0].mxu0
  %v769 = vpop.f32.mrb[0].mxu0
  %770 = vdwg.mxu0
  %v771 = vadd.f32 %v109, %v766
  %v772 = vxor.u32 %v771, 2147483648
  %v773 = vmul.f32 %v772, 1.442695
  %v774 = vpow.pop %v773
  %v775 = vadd.f32 %v774, 1.0
  %v776 = vrcp.pop %v775
  %v777 = vmul.f32 1.0, %v776
  %v778 = vtanh.pop %v771
  %v780 = vrot.slane %v633, 6
  %v782 = vmul.f32 %v777, %v780
  %784 = vrot.lane.b32.xlu0 %v778, 32
  %v785 = vpop.permute.xlu0 %784
  %v787 = vmul.f32 %v777, %v785
  %789 = vrot.lane.b32.xlu0 %v787, 32
  %v790 = vpop.permute.xlu0 %789
  %v792 = vadd.f32 %v782, %v790
  %v793 = vtanh.pop %v792
  %795 = vrot.lane.b32.xlu0 %v793, 32
  %v796 = vpop.permute.xlu0 %795
  %v798 = vmul.f32 %v777, %v796
  %800 = vrot.lane.b32.xlu0 %v639, 64
  %v801 = vpop.permute.xlu0 %800
  %v804 = vrot.slane %v719, 2
  %805 = vrot.lane.b32.xlu0 %v804, 96
  %v806 = vpop.permute.xlu0 %805
  %v808 = vsel %vm67, %v801, %v806
  %v809 = vpack.c.bf16 %v808, %v808
  %v811 = vrot.slane %v809, 3
  %v813 = vsel %vm306, %v811, 0
  %815 = vmatprep.subr.bf16.mxu0 0
  %816 = vmatpush1.bf16.msra.mxu0 %v298
  %817 = vmatprep.subr.bf16.mxu0 0
  %818 = vmatpush1.bf16.msra.mxu0 %v299
  %819 = vmatprep.subr.bf16.mxu0 0
  %820 = vmatpush1.bf16.msra.mxu0 %v300
  %821 = vmatprep.subr.bf16.mxu0 0
  %822 = vmatpush1.bf16.msra.mxu0 %v301
  %823 = vmatprep.subr.bf16.mxu0 0
  %824 = vmatpush1.bf16.msra.mxu0 0
  %825 = vmatprep.subr.bf16.mxu0 0
  %826 = vmatpush1.bf16.msra.mxu0 0
  %827 = vmatprep.subr.bf16.mxu0 0
  %828 = vmatpush1.bf16.msra.mxu0 0
  %829 = vmatprep.subr.bf16.mxu0 0
  %830 = vmatpush1.bf16.msra.mxu0 0
  %831 = vmatprep.subr.bf16.mxu0 0
  %832 = vmatpush1.bf16.msra.mxu0 0
  %833 = vmatprep.subr.bf16.mxu0 0
  %834 = vmatpush1.bf16.msra.mxu0 0
  %835 = vmatprep.subr.bf16.mxu0 0
  %836 = vmatpush1.bf16.msra.mxu0 0
  %837 = vmatprep.subr.bf16.mxu0 0
  %838 = vmatpush1.bf16.msra.mxu0 0
  %839 = vmatprep.subr.bf16.mxu0 0
  %840 = vmatpush1.bf16.msra.mxu0 0
  %841 = vmatprep.subr.bf16.mxu0 0
  %842 = vmatpush1.bf16.msra.mxu0 0
  %843 = vmatprep.subr.bf16.mxu0 0
  %844 = vmatpush1.bf16.msra.mxu0 0
  %845 = vmatprep.subr.bf16.mxu0 0
  %846 = vmatpush1.bf16.msra.mxu0 0
  %847 = vmatprep.mubr.bf16.mxu0 0
  %848 = vmatmul.mubr.bf16.gmra.mrb[0].mxu0 %v813
  %v849 = vpop.f32.mrb[0].mxu0
  %v850 = vadd.f32 %v280, %v849
  %v851 = vpop.f32.mrb[0].mxu0
  %v852 = vpop.f32.mrb[0].mxu0
  %v853 = vpop.f32.mrb[0].mxu0
  %854 = vdwg.mxu0
  %v855 = vxor.u32 %v850, 2147483648
  %v856 = vmul.f32 %v855, 1.442695
  %v857 = vpow.pop %v856
  %v858 = vadd.f32 %v857, 1.0
  %v859 = vrcp.pop %v858
  %v860 = vmul.f32 1.0, %v859
  %v861 = vtanh.pop %v850
  %v862 = vmul.f32 %v860, %v713
  %864 = vrot.lane.b32.xlu0 %v861, 32
  %v865 = vpop.permute.xlu0 %864
  %v867 = vmul.f32 %v860, %v865
  %869 = vrot.lane.b32.xlu0 %v867, 32
  %v870 = vpop.permute.xlu0 %869
  %v872 = vadd.f32 %v862, %v870
  %v873 = vtanh.pop %v872
  %875 = vrot.lane.b32.xlu0 %v873, 32
  %v876 = vpop.permute.xlu0 %875
  %v878 = vmul.f32 %v860, %v876
  %v879 = vmax.f32 %v878, 0.0
  %v882 = vunpack.c.l.s4 1983009808
  %v883 = vunpack.c.0.s8 %v882
  %v884 = vlaneseq
  %v885 = vshrl.u32 %v884, 7
  %v886 = vsub.s32 %v883, %v885
  %v887 = vrot.slane %v879, %v886
  %888 = vrot.lane.b32.xlu0 %v887, 32
  %v889 = vpop.permute.xlu0 %888
  %vm891 = vcmask 1042176
  %892 = vst.msk [vmem:[%s6] sm:$0x3] %vm891, %v889
  %v893 = vpack.c.bf16 %v798, %v798
  %895 = vrot.lane.b32.xlu0 %v893, 64
  %v896 = vpop.permute.xlu0 %895
  %v898 = vsel %vm67, %v896, 0
  %900 = vmatprep.subr.bf16.mxu0 0
  %901 = vmatpush1.bf16.msra.mxu0 %v120
  %902 = vmatprep.subr.bf16.mxu0 0
  %903 = vmatpush1.bf16.msra.mxu0 %v121
  %904 = vmatprep.subr.bf16.mxu0 0
  %905 = vmatpush1.bf16.msra.mxu0 0
  %906 = vmatprep.subr.bf16.mxu0 0
  %907 = vmatpush1.bf16.msra.mxu0 0
  %908 = vmatprep.subr.bf16.mxu0 0
  %909 = vmatpush1.bf16.msra.mxu0 0
  %910 = vmatprep.subr.bf16.mxu0 0
  %911 = vmatpush1.bf16.msra.mxu0 0
  %912 = vmatprep.subr.bf16.mxu0 0
  %913 = vmatpush1.bf16.msra.mxu0 0
  %914 = vmatprep.subr.bf16.mxu0 0
  %915 = vmatpush1.bf16.msra.mxu0 0
  %916 = vmatprep.subr.bf16.mxu0 0
  %917 = vmatpush1.bf16.msra.mxu0 0
  %918 = vmatprep.subr.bf16.mxu0 0
  %919 = vmatpush1.bf16.msra.mxu0 0
  %920 = vmatprep.subr.bf16.mxu0 0
  %921 = vmatpush1.bf16.msra.mxu0 0
  %922 = vmatprep.subr.bf16.mxu0 0
  %923 = vmatpush1.bf16.msra.mxu0 0
  %924 = vmatprep.subr.bf16.mxu0 0
  %925 = vmatpush1.bf16.msra.mxu0 0
  %926 = vmatprep.subr.bf16.mxu0 0
  %927 = vmatpush1.bf16.msra.mxu0 0
  %928 = vmatprep.subr.bf16.mxu0 0
  %929 = vmatpush1.bf16.msra.mxu0 0
  %930 = vmatprep.subr.bf16.mxu0 0
  %931 = vmatpush1.bf16.msra.mxu0 0
  %932 = vmatprep.mubr.bf16.mxu0 0
  %933 = vmatmul.mubr.bf16.gmra.mrb[0].mxu0 %v898
  %v934 = vpop.f32.mrb[0].mxu0
  %v935 = vadd.f32 0.0, %v934
  %v936 = vpop.f32.mrb[0].mxu0
  %v937 = vpop.f32.mrb[0].mxu0
  %v938 = vpop.f32.mrb[0].mxu0
  %939 = vdwg.mxu0
  %v940 = vadd.f32 %v48, %v935
  %v941 = vxor.u32 %v940, 2147483648
  %v942 = vmul.f32 %v941, 1.442695
  %v943 = vpow.pop %v942
  %v944 = vadd.f32 %v943, 1.0
  %v945 = vrcp.pop %v944
  %v946 = vmul.f32 1.0, %v945
  %v947 = vtanh.pop %v940
  %v948 = vmul.f32 %v946, %v792
  %950 = vrot.lane.b32.xlu0 %v947, 32
  %v951 = vpop.permute.xlu0 %950
  %v953 = vmul.f32 %v946, %v951
  %955 = vrot.lane.b32.xlu0 %v953, 32
  %v956 = vpop.permute.xlu0 %955
  %v958 = vadd.f32 %v948, %v956
  %v959 = vtanh.pop %v958
  %961 = vrot.lane.b32.xlu0 %v959, 32
  %v962 = vpop.permute.xlu0 %961
  %v964 = vmul.f32 %v946, %v962
  %966 = vrot.lane.b32.xlu0 %v798, 64
  %v967 = vpop.permute.xlu0 %966
  %970 = vrot.lane.b32.xlu0 %v878, 96
  %v971 = vpop.permute.xlu0 %970
  %v973 = vsel %vm67, %v967, %v971
  %v974 = vpack.c.bf16 %v973, %v973
  %v976 = vsel %vm306, %v974, 0
  %978 = vmatprep.subr.bf16.mxu0 0
  %979 = vmatpush1.bf16.msra.mxu0 %v298
  %980 = vmatprep.subr.bf16.mxu0 0
  %981 = vmatpush1.bf16.msra.mxu0 %v299
  %982 = vmatprep.subr.bf16.mxu0 0
  %983 = vmatpush1.bf16.msra.mxu0 %v300
  %984 = vmatprep.subr.bf16.mxu0 0
  %985 = vmatpush1.bf16.msra.mxu0 %v301
  %986 = vmatprep.subr.bf16.mxu0 0
  %987 = vmatpush1.bf16.msra.mxu0 0
  %988 = vmatprep.subr.bf16.mxu0 0
  %989 = vmatpush1.bf16.msra.mxu0 0
  %990 = vmatprep.subr.bf16.mxu0 0
  %991 = vmatpush1.bf16.msra.mxu0 0
  %992 = vmatprep.subr.bf16.mxu0 0
  %993 = vmatpush1.bf16.msra.mxu0 0
  %994 = vmatprep.subr.bf16.mxu0 0
  %995 = vmatpush1.bf16.msra.mxu0 0
  %996 = vmatprep.subr.bf16.mxu0 0
  %997 = vmatpush1.bf16.msra.mxu0 0
  %998 = vmatprep.subr.bf16.mxu0 0
  %999 = vmatpush1.bf16.msra.mxu0 0
  %1000 = vmatprep.subr.bf16.mxu0 0
  %1001 = vmatpush1.bf16.msra.mxu0 0
  %1002 = vmatprep.subr.bf16.mxu0 0
  %1003 = vmatpush1.bf16.msra.mxu0 0
  %1004 = vmatprep.subr.bf16.mxu0 0
  %1005 = vmatpush1.bf16.msra.mxu0 0
  %1006 = vmatprep.subr.bf16.mxu0 0
  %1007 = vmatpush1.bf16.msra.mxu0 0
  %1008 = vmatprep.subr.bf16.mxu0 0
  %1009 = vmatpush1.bf16.msra.mxu0 0
  %1010 = vmatprep.mubr.bf16.mxu0 0
  %1011 = vmatmul.mubr.bf16.gmra.mrb[0].mxu0 %v976
  %v1012 = vpop.f32.mrb[0].mxu0
  %v1013 = vadd.f32 %v280, %v1012
  %v1014 = vpop.f32.mrb[0].mxu0
  %v1015 = vpop.f32.mrb[0].mxu0
  %v1016 = vpop.f32.mrb[0].mxu0
  %1017 = vdwg.mxu0
  %v1018 = vxor.u32 %v1013, 2147483648
  %v1019 = vmul.f32 %v1018, 1.442695
  %v1020 = vpow.pop %v1019
  %v1021 = vadd.f32 %v1020, 1.0
  %v1022 = vrcp.pop %v1021
  %v1023 = vmul.f32 1.0, %v1022
  %v1024 = vtanh.pop %v1013
  %v1025 = vmul.f32 %v1023, %v872
  %1027 = vrot.lane.b32.xlu0 %v1024, 32
  %v1028 = vpop.permute.xlu0 %1027
  %v1030 = vmul.f32 %v1023, %v1028
  %1032 = vrot.lane.b32.xlu0 %v1030, 32
  %v1033 = vpop.permute.xlu0 %1032
  %v1035 = vadd.f32 %v1025, %v1033
  %v1036 = vtanh.pop %v1035
  %1038 = vrot.lane.b32.xlu0 %v1036, 32
  %v1039 = vpop.permute.xlu0 %1038
  %v1041 = vmul.f32 %v1023, %v1039
  %v1042 = vmax.f32 %v1041, 0.0
  %v1045 = vunpack.c.l.s4 1983009808
  %v1046 = vunpack.c.0.s8 %v1045
  %v1047 = vlaneseq
  %v1048 = vshrl.u32 %v1047, 7
  %v1049 = vsub.s32 %v1046, %v1048
  %v1050 = vrot.slane %v1042, %v1049
  %1051 = vrot.lane.b32.xlu0 %v1050, 64
  %v1052 = vpop.permute.xlu0 %1051
  %1054 = vst.msk [vmem:[%s6 + $0x2] sm:$0x3] %vm386, %v1052
  %v1055 = vpack.c.bf16 %v964, %v964
  %1057 = vrot.lane.b32.xlu0 %v1055, 64
  %v1058 = vpop.permute.xlu0 %1057
  %v1060 = vsel %vm67, %v1058, 0
  %1062 = vmatprep.subr.bf16.mxu0 0
  %1063 = vmatpush1.bf16.msra.mxu0 %v120
  %1064 = vmatprep.subr.bf16.mxu0 0
  %1065 = vmatpush1.bf16.msra.mxu0 %v121
  %1066 = vmatprep.subr.bf16.mxu0 0
  %1067 = vmatpush1.bf16.msra.mxu0 0
  %1068 = vmatprep.subr.bf16.mxu0 0
  %1069 = vmatpush1.bf16.msra.mxu0 0
  %1070 = vmatprep.subr.bf16.mxu0 0
  %1071 = vmatpush1.bf16.msra.mxu0 0
  %1072 = vmatprep.subr.bf16.mxu0 0
  %1073 = vmatpush1.bf16.msra.mxu0 0
  %1074 = vmatprep.subr.bf16.mxu0 0
  %1075 = vmatpush1.bf16.msra.mxu0 0
  %1076 = vmatprep.subr.bf16.mxu0 0
  %1077 = vmatpush1.bf16.msra.mxu0 0
  %1078 = vmatprep.subr.bf16.mxu0 0
  %1079 = vmatpush1.bf16.msra.mxu0 0
  %1080 = vmatprep.subr.bf16.mxu0 0
  %1081 = vmatpush1.bf16.msra.mxu0 0
  %1082 = vmatprep.subr.bf16.mxu0 0
  %1083 = vmatpush1.bf16.msra.mxu0 0
  %1084 = vmatprep.subr.bf16.mxu0 0
  %1085 = vmatpush1.bf16.msra.mxu0 0
  %1086 = vmatprep.subr.bf16.mxu0 0
  %1087 = vmatpush1.bf16.msra.mxu0 0
  %1088 = vmatprep.subr.bf16.mxu0 0
  %1089 = vmatpush1.bf16.msra.mxu0 0
  %1090 = vmatprep.subr.bf16.mxu0 0
  %1091 = vmatpush1.bf16.msra.mxu0 0
  %1092 = vmatprep.subr.bf16.mxu0 0
  %1093 = vmatpush1.bf16.msra.mxu0 0
  %1094 = vmatprep.mubr.bf16.mxu0 0
  %1095 = vmatmul.mubr.bf16.gmra.mrb[0].mxu0 %v1060
  %v1096 = vpop.f32.mrb[0].mxu0
  %v1097 = vadd.f32 0.0, %v1096
  %v1098 = vpop.f32.mrb[0].mxu0
  %v1099 = vpop.f32.mrb[0].mxu0
  %v1100 = vpop.f32.mrb[0].mxu0
  %1101 = vdwg.mxu0
  %v1102 = vadd.f32 %v48, %v1097
  %v1103 = vxor.u32 %v1102, 2147483648
  %v1104 = vmul.f32 %v1103, 1.442695
  %v1105 = vpow.pop %v1104
  %v1106 = vadd.f32 %v1105, 1.0
  %v1107 = vrcp.pop %v1106
  %v1108 = vmul.f32 1.0, %v1107
  %v1109 = vtanh.pop %v1102
  %v1110 = vmul.f32 %v1108, %v958
  %1112 = vrot.lane.b32.xlu0 %v1109, 32
  %v1113 = vpop.permute.xlu0 %1112
  %v1115 = vmul.f32 %v1108, %v1113
  %1117 = vrot.lane.b32.xlu0 %v1115, 32
  %v1118 = vpop.permute.xlu0 %1117
  %v1120 = vadd.f32 %v1110, %v1118
  %v1121 = vtanh.pop %v1120
  %1123 = vrot.lane.b32.xlu0 %v1121, 32
  %v1124 = vpop.permute.xlu0 %1123
  %v1126 = vmul.f32 %v1108, %v1124
  %1128 = vrot.lane.b32.xlu0 %v964, 64
  %v1129 = vpop.permute.xlu0 %1128
  %1132 = vrot.lane.b32.xlu0 %v1041, 96
  %v1133 = vpop.permute.xlu0 %1132
  %v1135 = vsel %vm67, %v1129, %v1133
  %v1136 = vpack.c.bf16 %v1135, %v1135
  %v1138 = vsel %vm306, %v1136, 0
  %1140 = vmatprep.subr.bf16.mxu0 0
  %1141 = vmatpush1.bf16.msra.mxu0 %v298
  %1142 = vmatprep.subr.bf16.mxu0 0
  %1143 = vmatpush1.bf16.msra.mxu0 %v299
  %1144 = vmatprep.subr.bf16.mxu0 0
  %1145 = vmatpush1.bf16.msra.mxu0 %v300
  %1146 = vmatprep.subr.bf16.mxu0 0
  %1147 = vmatpush1.bf16.msra.mxu0 %v301
  %1148 = vmatprep.subr.bf16.mxu0 0
  %1149 = vmatpush1.bf16.msra.mxu0 0
  %1150 = vmatprep.subr.bf16.mxu0 0
  %1151 = vmatpush1.bf16.msra.mxu0 0
  %1152 = vmatprep.subr.bf16.mxu0 0
  %1153 = vmatpush1.bf16.msra.mxu0 0
  %1154 = vmatprep.subr.bf16.mxu0 0
  %1155 = vmatpush1.bf16.msra.mxu0 0
  %1156 = vmatprep.subr.bf16.mxu0 0
  %1157 = vmatpush1.bf16.msra.mxu0 0
  %1158 = vmatprep.subr.bf16.mxu0 0
  %1159 = vmatpush1.bf16.msra.mxu0 0
  %1160 = vmatprep.subr.bf16.mxu0 0
  %1161 = vmatpush1.bf16.msra.mxu0 0
  %1162 = vmatprep.subr.bf16.mxu0 0
  %1163 = vmatpush1.bf16.msra.mxu0 0
  %1164 = vmatprep.subr.bf16.mxu0 0
  %1165 = vmatpush1.bf16.msra.mxu0 0
  %1166 = vmatprep.subr.bf16.mxu0 0
  %1167 = vmatpush1.bf16.msra.mxu0 0
  %1168 = vmatprep.subr.bf16.mxu0 0
  %1169 = vmatpush1.bf16.msra.mxu0 0
  %1170 = vmatprep.subr.bf16.mxu0 0
  %1171 = vmatpush1.bf16.msra.mxu0 0
  %1172 = vmatprep.mubr.bf16.mxu0 0
  %1173 = vmatmul.mubr.bf16.gmra.mrb[0].mxu0 %v1138
  %v1174 = vpop.f32.mrb[0].mxu0
  %v1175 = vadd.f32 %v280, %v1174
  %v1176 = vpop.f32.mrb[0].mxu0
  %v1177 = vpop.f32.mrb[0].mxu0
  %v1178 = vpop.f32.mrb[0].mxu0
  %1179 = vdwg.mxu0
  %v1180 = vxor.u32 %v1175, 2147483648
  %v1181 = vmul.f32 %v1180, 1.442695
  %v1182 = vpow.pop %v1181
  %v1183 = vadd.f32 %v1182, 1.0
  %v1184 = vrcp.pop %v1183
  %v1185 = vmul.f32 1.0, %v1184
  %v1186 = vtanh.pop %v1175
  %v1187 = vmul.f32 %v1185, %v1035
  %1189 = vrot.lane.b32.xlu0 %v1186, 32
  %v1190 = vpop.permute.xlu0 %1189
  %v1192 = vmul.f32 %v1185, %v1190
  %1194 = vrot.lane.b32.xlu0 %v1192, 32
  %v1195 = vpop.permute.xlu0 %1194
  %v1197 = vadd.f32 %v1187, %v1195
  %v1198 = vtanh.pop %v1197
  %1200 = vrot.lane.b32.xlu0 %v1198, 32
  %v1201 = vpop.permute.xlu0 %1200
  %v1203 = vmul.f32 %v1185, %v1201
  %v1204 = vmax.f32 %v1203, 0.0
  %v1207 = vunpack.c.l.s4 1983009808
  %v1208 = vunpack.c.0.s8 %v1207
  %v1209 = vlaneseq
  %v1210 = vshrl.u32 %v1209, 7
  %v1211 = vsub.s32 %v1208, %v1210
  %v1212 = vrot.slane %v1204, %v1211
  %1213 = vrot.lane.b32.xlu0 %v1212, 96
  %v1214 = vpop.permute.xlu0 %1213
  %1216 = vst.msk [vmem:[%s6 + $0x2] sm:$0x3] %vm559, %v1214
  %v1217 = vpack.c.bf16 %v1126, %v1126
  %1219 = vrot.lane.b32.xlu0 %v1217, 64
  %v1220 = vpop.permute.xlu0 %1219
  %v1222 = vsel %vm67, %v1220, 0
  %1224 = vmatprep.subr.bf16.mxu0 0
  %1225 = vmatpush1.bf16.msra.mxu0 %v120
  %1226 = vmatprep.subr.bf16.mxu0 0
  %1227 = vmatpush1.bf16.msra.mxu0 %v121
  %1228 = vmatprep.subr.bf16.mxu0 0
  %1229 = vmatpush1.bf16.msra.mxu0 0
  %1230 = vmatprep.subr.bf16.mxu0 0
  %1231 = vmatpush1.bf16.msra.mxu0 0
  %1232 = vmatprep.subr.bf16.mxu0 0
  %1233 = vmatpush1.bf16.msra.mxu0 0
  %1234 = vmatprep.subr.bf16.mxu0 0
  %1235 = vmatpush1.bf16.msra.mxu0 0
  %1236 = vmatprep.subr.bf16.mxu0 0
  %1237 = vmatpush1.bf16.msra.mxu0 0
  %1238 = vmatprep.subr.bf16.mxu0 0
  %1239 = vmatpush1.bf16.msra.mxu0 0
  %1240 = vmatprep.subr.bf16.mxu0 0
  %1241 = vmatpush1.bf16.msra.mxu0 0
  %1242 = vmatprep.subr.bf16.mxu0 0
  %1243 = vmatpush1.bf16.msra.mxu0 0
  %1244 = vmatprep.subr.bf16.mxu0 0
  %1245 = vmatpush1.bf16.msra.mxu0 0
  %1246 = vmatprep.subr.bf16.mxu0 0
  %1247 = vmatpush1.bf16.msra.mxu0 0
  %1248 = vmatprep.subr.bf16.mxu0 0
  %1249 = vmatpush1.bf16.msra.mxu0 0
  %1250 = vmatprep.subr.bf16.mxu0 0
  %1251 = vmatpush1.bf16.msra.mxu0 0
  %1252 = vmatprep.subr.bf16.mxu0 0
  %1253 = vmatpush1.bf16.msra.mxu0 0
  %1254 = vmatprep.subr.bf16.mxu0 0
  %1255 = vmatpush1.bf16.msra.mxu0 0
  %1256 = vmatprep.mubr.bf16.mxu0 0
  %1257 = vmatmul.mubr.bf16.gmra.mrb[0].mxu0 %v1222
  %v1258 = vpop.f32.mrb[0].mxu0
  %v1259 = vadd.f32 0.0, %v1258
  %v1260 = vpop.f32.mrb[0].mxu0
  %v1261 = vpop.f32.mrb[0].mxu0
  %v1262 = vpop.f32.mrb[0].mxu0
  %1263 = vdwg.mxu0
  %v1264 = vadd.f32 %v48, %v1259
  %v1265 = vxor.u32 %v1264, 2147483648
  %v1266 = vmul.f32 %v1265, 1.442695
  %v1267 = vpow.pop %v1266
  %v1268 = vadd.f32 %v1267, 1.0
  %v1269 = vrcp.pop %v1268
  %v1270 = vmul.f32 1.0, %v1269
  %v1271 = vtanh.pop %v1264
  %v1272 = vmul.f32 %v1270, %v1120
  %1274 = vrot.lane.b32.xlu0 %v1271, 32
  %v1275 = vpop.permute.xlu0 %1274
  %v1277 = vmul.f32 %v1270, %v1275
  %1279 = vrot.lane.b32.xlu0 %v1277, 32
  %v1280 = vpop.permute.xlu0 %1279
  %v1282 = vadd.f32 %v1272, %v1280
  %v1283 = vtanh.pop %v1282
  %1285 = vrot.lane.b32.xlu0 %v1283, 32
  %v1286 = vpop.permute.xlu0 %1285
  %v1288 = vmul.f32 %v1270, %v1286
  %1290 = vrot.lane.b32.xlu0 %v1126, 64
  %v1291 = vpop.permute.xlu0 %1290
  %1294 = vrot.lane.b32.xlu0 %v1203, 96
  %v1295 = vpop.permute.xlu0 %1294
  %v1297 = vsel %vm67, %v1291, %v1295
  %v1298 = vpack.c.bf16 %v1297, %v1297
  %v1300 = vsel %vm306, %v1298, 0
  %1302 = vmatprep.subr.bf16.mxu0 0
  %1303 = vmatpush1.bf16.msra.mxu0 %v298
  %1304 = vmatprep.subr.bf16.mxu0 0
  %1305 = vmatpush1.bf16.msra.mxu0 %v299
  %1306 = vmatprep.subr.bf16.mxu0 0
  %1307 = vmatpush1.bf16.msra.mxu0 %v300
  %1308 = vmatprep.subr.bf16.mxu0 0
  %1309 = vmatpush1.bf16.msra.mxu0 %v301
  %1310 = vmatprep.subr.bf16.mxu0 0
  %1311 = vmatpush1.bf16.msra.mxu0 0
  %1312 = vmatprep.subr.bf16.mxu0 0
  %1313 = vmatpush1.bf16.msra.mxu0 0
  %1314 = vmatprep.subr.bf16.mxu0 0
  %1315 = vmatpush1.bf16.msra.mxu0 0
  %1316 = vmatprep.subr.bf16.mxu0 0
  %1317 = vmatpush1.bf16.msra.mxu0 0
  %1318 = vmatprep.subr.bf16.mxu0 0
  %1319 = vmatpush1.bf16.msra.mxu0 0
  %1320 = vmatprep.subr.bf16.mxu0 0
  %1321 = vmatpush1.bf16.msra.mxu0 0
  %1322 = vmatprep.subr.bf16.mxu0 0
  %1323 = vmatpush1.bf16.msra.mxu0 0
  %1324 = vmatprep.subr.bf16.mxu0 0
  %1325 = vmatpush1.bf16.msra.mxu0 0
  %1326 = vmatprep.subr.bf16.mxu0 0
  %1327 = vmatpush1.bf16.msra.mxu0 0
  %1328 = vmatprep.subr.bf16.mxu0 0
  %1329 = vmatpush1.bf16.msra.mxu0 0
  %1330 = vmatprep.subr.bf16.mxu0 0
  %1331 = vmatpush1.bf16.msra.mxu0 0
  %1332 = vmatprep.subr.bf16.mxu0 0
  %1333 = vmatpush1.bf16.msra.mxu0 0
  %1334 = vmatprep.mubr.bf16.mxu0 0
  %1335 = vmatmul.mubr.bf16.gmra.mrb[0].mxu0 %v1300
  %v1336 = vpop.f32.mrb[0].mxu0
  %v1337 = vadd.f32 %v280, %v1336
  %v1338 = vpop.f32.mrb[0].mxu0
  %v1339 = vpop.f32.mrb[0].mxu0
  %v1340 = vpop.f32.mrb[0].mxu0
  %1341 = vdwg.mxu0
  %v1342 = vxor.u32 %v1337, 2147483648
  %v1343 = vmul.f32 %v1342, 1.442695
  %v1344 = vpow.pop %v1343
  %v1345 = vadd.f32 %v1344, 1.0
  %v1346 = vrcp.pop %v1345
  %v1347 = vmul.f32 1.0, %v1346
  %v1348 = vtanh.pop %v1337
  %v1349 = vmul.f32 %v1347, %v1197
  %1351 = vrot.lane.b32.xlu0 %v1348, 32
  %v1352 = vpop.permute.xlu0 %1351
  %v1354 = vmul.f32 %v1347, %v1352
  %1356 = vrot.lane.b32.xlu0 %v1354, 32
  %v1357 = vpop.permute.xlu0 %1356
  %v1359 = vadd.f32 %v1349, %v1357
  %v1360 = vtanh.pop %v1359
  %1362 = vrot.lane.b32.xlu0 %v1360, 32
  %v1363 = vpop.permute.xlu0 %1362
  %v1365 = vmul.f32 %v1347, %v1363
  %v1366 = vmax.f32 %v1365, 0.0
  %1367 = vst.msk [vmem:[%s6 + $0x2] sm:$0x3] %vm721, %v1366
  %1369 = vrot.lane.b32.xlu0 %v1288, 64
  %v1370 = vpop.permute.xlu0 %1369
  %1373 = vrot.lane.b32.xlu0 %v1365, 96
  %v1374 = vpop.permute.xlu0 %1373
  %v1376 = vsel %vm67, %v1370, %v1374
  %v1377 = vpack.c.bf16 %v1376, %v1376
  %v1379 = vsel %vm306, %v1377, 0
  %1381 = vmatprep.subr.bf16.mxu0 0
  %1382 = vmatpush1.bf16.msra.mxu0 %v298
  %1383 = vmatprep.subr.bf16.mxu0 0
  %1384 = vmatpush1.bf16.msra.mxu0 %v299
  %1385 = vmatprep.subr.bf16.mxu0 0
  %1386 = vmatpush1.bf16.msra.mxu0 %v300
  %1387 = vmatprep.subr.bf16.mxu0 0
  %1388 = vmatpush1.bf16.msra.mxu0 %v301
  %1389 = vmatprep.subr.bf16.mxu0 0
  %1390 = vmatpush1.bf16.msra.mxu0 0
  %1391 = vmatprep.subr.bf16.mxu0 0
  %1392 = vmatpush1.bf16.msra.mxu0 0
  %1393 = vmatprep.subr.bf16.mxu0 0
  %1394 = vmatpush1.bf16.msra.mxu0 0
  %1395 = vmatprep.subr.bf16.mxu0 0
  %1396 = vmatpush1.bf16.msra.mxu0 0
  %1397 = vmatprep.subr.bf16.mxu0 0
  %1398 = vmatpush1.bf16.msra.mxu0 0
  %1399 = vmatprep.subr.bf16.mxu0 0
  %1400 = vmatpush1.bf16.msra.mxu0 0
  %1401 = vmatprep.subr.bf16.mxu0 0
  %1402 = vmatpush1.bf16.msra.mxu0 0
  %1403 = vmatprep.subr.bf16.mxu0 0
  %1404 = vmatpush1.bf16.msra.mxu0 0
  %1405 = vmatprep.subr.bf16.mxu0 0
  %1406 = vmatpush1.bf16.msra.mxu0 0
  %1407 = vmatprep.subr.bf16.mxu0 0
  %1408 = vmatpush1.bf16.msra.mxu0 0
  %1409 = vmatprep.subr.bf16.mxu0 0
  %1410 = vmatpush1.bf16.msra.mxu0 0
  %1411 = vmatprep.subr.bf16.mxu0 0
  %1412 = vmatpush1.bf16.msra.mxu0 0
  %1413 = vmatprep.mubr.bf16.mxu0 0
  %1414 = vmatmul.mubr.bf16.gmra.mrb[0].mxu0 %v1379
  %v1415 = vpop.f32.mrb[0].mxu0
  %v1416 = vadd.f32 %v280, %v1415
  %v1417 = vpop.f32.mrb[0].mxu0
  %v1418 = vpop.f32.mrb[0].mxu0
  %v1419 = vpop.f32.mrb[0].mxu0
  %1420 = vdwg.mxu0
  %v1421 = vxor.u32 %v1416, 2147483648
  %v1422 = vmul.f32 %v1421, 1.442695
  %v1423 = vpow.pop %v1422
  %v1424 = vadd.f32 %v1423, 1.0
  %v1425 = vrcp.pop %v1424
  %v1426 = vmul.f32 1.0, %v1425
  %v1427 = vtanh.pop %v1416
  %v1428 = vmul.f32 %v1426, %v1359
  %1430 = vrot.lane.b32.xlu0 %v1427, 32
  %v1431 = vpop.permute.xlu0 %1430
  %v1433 = vmul.f32 %v1426, %v1431
  %1435 = vrot.lane.b32.xlu0 %v1433, 32
  %v1436 = vpop.permute.xlu0 %1435
  %v1438 = vadd.f32 %v1428, %v1436
  %v1439 = vtanh.pop %v1438
  %1441 = vrot.lane.b32.xlu0 %v1439, 32
  %v1442 = vpop.permute.xlu0 %1441
  %v1444 = vmul.f32 %v1426, %v1442
  %v1445 = vmax.f32 %v1444, 0.0
  %v1448 = vunpack.c.l.s4 1983009808
  %v1449 = vunpack.c.0.s8 %v1448
  %v1450 = vlaneseq
  %v1451 = vshrl.u32 %v1450, 7
  %v1452 = vsub.s32 %v1449, %v1451
  %v1453 = vrot.slane %v1445, %v1452
  %1454 = vrot.lane.b32.xlu0 %v1453, 32
  %v1455 = vpop.permute.xlu0 %1454
  %1457 = vst.msk [vmem:[%s6 + $0x2] sm:$0x3] %vm891, %v1455
  // Predicated region
  $region26: #{decoder_rnn_forward.1} parent=0 // pred_check
    _
  $region27: #{decoder_rnn_forward.1} parent=0 // pred_check_branch
    %1459 = sbr.rel (0) target = $region29
  $region28: #{decoder_rnn_forward.1} parent=0 // pred_region
    _
  $region29: #{decoder_rnn_forward.1} parent=0 // pred_fallthru
    _
  // Predicated region
  $region30: #{decoder_rnn_forward.1} parent=0 // pred_check
    _
  $region31: #{decoder_rnn_forward.1} parent=0 // pred_check_branch
    %1461 = sbr.rel (0) target = $region33
  $region32: #{decoder_rnn_forward.1} parent=0 // pred_region
    _
  $region33: #{decoder_rnn_forward.1} parent=0 // pred_fallthru
    _

</llo_original>
